<compile_context>
chip_gen: v7x
topology: tpu7x:2x2x1
jax: 0.10.0
libtpu: 0.0.40
codegen_flags: <defaults>
</compile_context>

<pallas_src>
import jax
import jax.numpy as jnp
from jax.experimental import pallas as pl
from jax.experimental.pallas import tpu as pltpu

IM_CHAN = 1          # Critic(im_chan=1, ...)
HIDDEN = 16          # Critic(..., hidden_dim=16)
DATA_LEN = 48        # "CGM data is 48 half hours in a day"
KSIZE = 4            # make_crit_block kernel_size
STRIDE = 2           # make_crit_block stride
BN_EPS = 1e-5
NEG_SLOPE = 0.2
CPAD = 128           # channel dims lane-padded to one vreg width
TAIL = 8             # extra zero rows so tap reads starting at j=2,3 stay in-bounds

# (cin, cout, final_layer) -- mirrors Critic.__init__
LAYER_CFG = [
    (IM_CHAN,    HIDDEN,     False),
    (HIDDEN,     HIDDEN * 2, False),
    (HIDDEN * 2, 1,          True),
]


def _conv_out_len(lin):
    return (lin - KSIZE) // STRIDE + 1


def _layer_lengths(l0):
    lens = [l0]
    for _ in LAYER_CFG:
        lens.append(_conv_out_len(lens[-1]))
    return lens


# ----------------------------- Pallas kernel ------------------------------- #

def _make_kernel(n, l0):
    """Build the fused Critic kernel for a static (batch, length).

    Activation row layout at every stage: row = sample * S + position, channel
    on lanes (padded to CPAD).  S halves each layer (S_in even, S_out = S_in/2),
    so tap j of ALL samples/positions is the single strided read
    rows[j : j + 2*R_out : 2]  (row m = sample*S_out + o  ->  input row
    sample*S_in + 2*o + j).  Real output rows (o < Lout) only ever read real
    input rows of the same sample; per-sample pad rows (o >= Lout) are masked
    out of BatchNorm and never feed a real row downstream.
    """
    lens = _layer_lengths(l0)                 # [48, 23, 10, 4]
    strides = [l0 + (l0 % 2)]                 # per-sample row stride per stage
    for _ in LAYER_CFG:
        assert strides[-1] % 2 == 0, "per-sample row stride must stay even"
        strides.append(strides[-1] // 2)      # [48, 24, 12, 6]
    r1, r2, r3 = n * strides[1], n * strides[2], n * strides[3]
    inv_cnt1 = 1.0 / float(n * lens[1])       # real rows feeding BN1
    inv_cnt2 = 1.0 / float(n * lens[2])       # real rows feeding BN2

    def kernel(x_ref, w1_ref, w2_ref, w3_ref, g1_ref, be1_ref, g2_ref, be2_ref,
               b3_ref, m1_ref, m2_ref, o_ref, h1_scr, h2_scr):

        def bn_lrelu(y, mask, inv_count, g_ref, b_ref):
            # Training-mode BatchNorm1d over the *real* rows only (two-pass
            # centered variance), fused into one affine, then LeakyReLU(0.2).
            # Padded lanes have gamma=beta=0 so they stay exactly 0.
            ym = y * mask
            mu = jnp.sum(ym, axis=0, keepdims=True) * inv_count
            d = (y - mu) * mask
            var = jnp.sum(d * d, axis=0, keepdims=True) * inv_count
            scale = g_ref[...] * jax.lax.rsqrt(var + BN_EPS)   # rsqrt -> EUP slot
            shift = b_ref[...] - mu * scale
            z = y * scale + shift
            return jnp.maximum(z, NEG_SLOPE * z)               # LeakyReLU(0.2)

        def conv_taps(src_ref, w_ref, rows):
            # Conv1d(k=4, s=2) as 4 strided-tap 128x128 matmuls accumulated in f32.
            acc = jnp.dot(src_ref[pl.ds(0, rows, STRIDE), :].astype(jnp.bfloat16),
                          w_ref[0], preferred_element_type=jnp.float32)
            for j in range(1, KSIZE):
                acc = acc + jnp.dot(
                    src_ref[pl.ds(j, rows, STRIDE), :].astype(jnp.bfloat16),
                    w_ref[j], preferred_element_type=jnp.float32)
            return acc

        # ---- layer 1: Conv1d(1, 16) specialized for Cin == 1 ----------------
        # Four (rows,1) x (1,128) broadcast multiply-adds (pure VPU, no MXU).
        y1 = x_ref[pl.ds(0, r1, STRIDE), :] * w1_ref[0:1, :]
        for j in range(1, KSIZE):
            y1 = y1 + x_ref[pl.ds(j, r1, STRIDE), :] * w1_ref[j:j + 1, :]
        h1 = bn_lrelu(y1, m1_ref[...], inv_cnt1, g1_ref, be1_ref)
        h1_scr[r1:r1 + TAIL, :] = jnp.zeros((TAIL, CPAD), h1_scr.dtype)
        h1_scr[0:r1, :] = h1.astype(h1_scr.dtype)

        # ---- layer 2: Conv1d(16, 32) + BN + LeakyReLU ------------------------
        y2 = conv_taps(h1_scr, w2_ref, r2)
        h2 = bn_lrelu(y2, m2_ref[...], inv_cnt2, g2_ref, be2_ref)
        h2_scr[r2:r2 + TAIL, :] = jnp.zeros((TAIL, CPAD), h2_scr.dtype)
        h2_scr[0:r2, :] = h2.astype(h2_scr.dtype)

        # ---- layer 3 (final): Conv1d(32, 1) + bias ---------------------------
        o_ref[...] = conv_taps(h2_scr, w3_ref, r3) + b3_ref[...]

    return kernel, strides, lens


# ------------------------- host-side packing (run once) --------------------- #

def _pad_vec(v):
    """(C,) -> (1, CPAD) f32, zero padded (padded lanes stay identically 0)."""
    return jnp.pad(v, (0, CPAD - v.shape[0])).reshape(1, CPAD).astype(jnp.float32)


def _pack_taps(w):
    """torch Conv1d weight (Cout, Cin, K) -> (K, CPAD, CPAD) bf16, [j, cin, cout]."""
    cout, cin, _ = w.shape
    wt = jnp.transpose(w, (2, 1, 0))                      # (K, Cin, Cout)
    wt = jnp.pad(wt, ((0, 0), (0, CPAD - cin), (0, CPAD - cout)))
    return wt.astype(jnp.bfloat16)


def pack_params(params):
    """Pack raw PyTorch-layout params once, outside the jitted forward."""
    (w1, _, g1, be1), (w2, _, g2, be2), (w3, b3, _, _) = params
    # Layer 1 (Cin=1) weight as per-tap rows: w1p[j, cout] = w1[cout, 0, j], f32.
    w1p = jnp.pad(jnp.transpose(w1[:, 0, :]),
                  ((0, 0), (0, CPAD - w1.shape[0]))).astype(jnp.float32)
    return dict(w1=w1p, w2=_pack_taps(w2), w3=_pack_taps(w3),
                g1=_pad_vec(g1), be1=_pad_vec(be1),
                g2=_pad_vec(g2), be2=_pad_vec(be2), b3=_pad_vec(b3))


def init_params(key):
    """Raw parameters in PyTorch layout.  Non-final conv biases are omitted:
    a bias added immediately before BatchNorm is exactly cancelled by the mean
    subtraction, so the forward pass is unchanged."""
    params = []
    for cin, cout, final in LAYER_CFG:
        key, kw, kb, kg, kbt = jax.random.split(key, 5)
        scale = 1.0 / jnp.sqrt(float(cin * KSIZE))
        w = jax.random.normal(kw, (cout, cin, KSIZE), jnp.float32) * scale
        if final:
            b = jax.random.normal(kb, (cout,), jnp.float32) * scale
            params.append((w, b, None, None))
        else:
            gamma = 1.0 + 0.1 * jax.random.normal(kg, (cout,), jnp.float32)
            beta = 0.1 * jax.random.normal(kbt, (cout,), jnp.float32)
            params.append((w, None, gamma, beta))
    return params


# --------------------------------- forward ---------------------------------- #

@jax.jit
def critic_forward(image, packed):
    """image: (N, im_chan, L) NCW -> (N, L_final), matching
    `crit_pred.view(len(crit_pred), -1)` (final conv has 1 output channel)."""
    n, cin, l0 = image.shape
    kernel, strides, lens = _make_kernel(n, l0)
    r1, r2, r3 = n * strides[1], n * strides[2], n * strides[3]

    # Input at its real width: rows = (sample, position), 1 channel lane.
    x = image.reshape(n, l0)
    x = jnp.pad(x, ((0, 0), (0, strides[0] - l0)))       # per-sample even stride
    x = x.reshape(n * strides[0], 1)
    x = jnp.pad(x, ((0, TAIL), (0, 0)))                  # in-bounds tail for taps 2,3

    def row_mask(per, real):
        m = (jnp.arange(per) < real).astype(jnp.float32)
        return jnp.tile(m, (n,)).reshape(n * per, 1)

    m1 = row_mask(strides[1], lens[1])
    m2 = row_mask(strides[2], lens[2])

    vmem = pl.BlockSpec(memory_space=pltpu.MemorySpace.VMEM)
    out = pl.pallas_call(
        kernel,
        out_shape=jax.ShapeDtypeStruct((r3, CPAD), jnp.float32),
        in_specs=[vmem] * 11,
        out_specs=vmem,
        scratch_shapes=[pltpu.VMEM((r1 + TAIL, CPAD), jnp.float32),
                        pltpu.VMEM((r2 + TAIL, CPAD), jnp.float32)],
        compiler_params=pltpu.CompilerParams(vmem_limit_bytes=16 * 1024 * 1024),
    )(x, packed["w1"], packed["w2"], packed["w3"],
      packed["g1"], packed["be1"], packed["g2"], packed["be2"], packed["b3"],
      m1, m2)

    # Real output channel is lane 0; real rows are local positions < L_final.
    return out.reshape(n, strides[3], CPAD)[:, :lens[3], 0]


# ------------------------------ pure-JAX reference -------------------------- #

def critic_reference(image, params):
    """Reference of the PyTorch Critic forward (training-mode BatchNorm)."""
    h = image
    for (w, b, gamma, beta), (cin, cout, final) in zip(params, LAYER_CFG):
        h = jax.lax.conv_general_dilated(
            h, w, window_strides=(STRIDE,), padding="VALID",
            dimension_numbers=("NCH", "OIH", "NCH"))
        if final:
            h = h + b.reshape(1, cout, 1)
        else:
            mu = jnp.mean(h, axis=(0, 2), keepdims=True)
            var = jnp.mean((h - mu) ** 2, axis=(0, 2), keepdims=True)
            h = (h - mu) * jax.lax.rsqrt(var + BN_EPS)
            h = h * gamma.reshape(1, cout, 1) + beta.reshape(1, cout, 1)
            h = jnp.where(h > 0, h, NEG_SLOPE * h)
    return h.reshape(h.shape[0], -1)


if __name__ == "__main__":
    key = jax.random.PRNGKey(0)
    kp, kx = jax.random.split(key)
    params = init_params(kp)
    packed = pack_params(params)            # host-side, once (hoisted out of jit)

    batch = 2
    image = jax.random.normal(kx, (batch, IM_CHAN, DATA_LEN), jnp.float32)

    out = jax.block_until_ready(critic_forward(image, packed))
    l_final = _layer_lengths(DATA_LEN)[-1]  # 48 -> 23 -> 10 -> 4
    assert out.shape == (batch, l_final), out.shape
    assert bool(jnp.all(jnp.isfinite(out)))

    ref = critic_reference(image, params)
    max_err = float(jnp.max(jnp.abs(out - ref)))
    # Error is dominated by bf16 matmul operands on layers 2/3 (f32 accumulation,
    # f32 BN/LeakyReLU, two-pass variance); typically ~1e-2 here.
    assert max_err < 1e-1, max_err
    print("KERNEL_OK")
</pallas_src>

<mosaic_0001>
module attributes {stable_mosaic.version = 11 : i64} {
  func.func @kernel(%arg0: memref<104x1xf32, #tpu.memory_space<vmem>>, %arg1: memref<4x128xf32, #tpu.memory_space<vmem>>, %arg2: memref<4x128x128xbf16, #tpu.memory_space<vmem>>, %arg3: memref<4x128x128xbf16, #tpu.memory_space<vmem>>, %arg4: memref<1x128xf32, #tpu.memory_space<vmem>>, %arg5: memref<1x128xf32, #tpu.memory_space<vmem>>, %arg6: memref<1x128xf32, #tpu.memory_space<vmem>>, %arg7: memref<1x128xf32, #tpu.memory_space<vmem>>, %arg8: memref<1x128xf32, #tpu.memory_space<vmem>>, %arg9: memref<48x1xf32, #tpu.memory_space<vmem>>, %arg10: memref<24x1xf32, #tpu.memory_space<vmem>>, %arg11: memref<12x128xf32, #tpu.memory_space<vmem>>, %arg12: memref<56x128xf32, #tpu.memory_space<vmem>>, %arg13: memref<32x128xf32, #tpu.memory_space<vmem>>) attributes {dimension_semantics = [], scalar_prefetch = 0 : i64, scratch_operands = 2 : i64, tpu.core_type = #tpu.core_type<tc>} {
    %c0 = arith.constant 0 : index
    %c0_0 = arith.constant 0 : index
    %0 = tpu.strided_load %arg0[%c0, %c0_0] {strides = array<i32: 2, 1>} : memref<104x1xf32, #tpu.memory_space<vmem>>, vector<48x1xf32>
    %c0_1 = arith.constant 0 : index
    %c0_2 = arith.constant 0 : index
    %1 = vector.load %arg1[%c0_1, %c0_2] : memref<4x128xf32, #tpu.memory_space<vmem>>, vector<1x128xf32>
    %2 = vector.broadcast %0 : vector<48x1xf32> to vector<48x128xf32>
    %3 = vector.broadcast %1 : vector<1x128xf32> to vector<48x128xf32>
    %4 = arith.mulf %2, %3 : vector<48x128xf32>
    %c1 = arith.constant 1 : index
    %c0_3 = arith.constant 0 : index
    %5 = tpu.strided_load %arg0[%c1, %c0_3] {strides = array<i32: 2, 1>} : memref<104x1xf32, #tpu.memory_space<vmem>>, vector<48x1xf32>
    %c1_4 = arith.constant 1 : index
    %c0_5 = arith.constant 0 : index
    %6 = vector.load %arg1[%c1_4, %c0_5] : memref<4x128xf32, #tpu.memory_space<vmem>>, vector<1x128xf32>
    %7 = vector.broadcast %5 : vector<48x1xf32> to vector<48x128xf32>
    %8 = vector.broadcast %6 : vector<1x128xf32> to vector<48x128xf32>
    %9 = arith.mulf %7, %8 : vector<48x128xf32>
    %10 = arith.addf %4, %9 : vector<48x128xf32>
    %c2 = arith.constant 2 : index
    %c0_6 = arith.constant 0 : index
    %11 = tpu.strided_load %arg0[%c2, %c0_6] {strides = array<i32: 2, 1>} : memref<104x1xf32, #tpu.memory_space<vmem>>, vector<48x1xf32>
    %c2_7 = arith.constant 2 : index
    %c0_8 = arith.constant 0 : index
    %12 = vector.load %arg1[%c2_7, %c0_8] : memref<4x128xf32, #tpu.memory_space<vmem>>, vector<1x128xf32>
    %13 = vector.broadcast %11 : vector<48x1xf32> to vector<48x128xf32>
    %14 = vector.broadcast %12 : vector<1x128xf32> to vector<48x128xf32>
    %15 = arith.mulf %13, %14 : vector<48x128xf32>
    %16 = arith.addf %10, %15 : vector<48x128xf32>
    %c3 = arith.constant 3 : index
    %c0_9 = arith.constant 0 : index
    %17 = tpu.strided_load %arg0[%c3, %c0_9] {strides = array<i32: 2, 1>} : memref<104x1xf32, #tpu.memory_space<vmem>>, vector<48x1xf32>
    %c3_10 = arith.constant 3 : index
    %c0_11 = arith.constant 0 : index
    %18 = vector.load %arg1[%c3_10, %c0_11] : memref<4x128xf32, #tpu.memory_space<vmem>>, vector<1x128xf32>
    %19 = vector.broadcast %17 : vector<48x1xf32> to vector<48x128xf32>
    %20 = vector.broadcast %18 : vector<1x128xf32> to vector<48x128xf32>
    %21 = arith.mulf %19, %20 : vector<48x128xf32>
    %22 = arith.addf %16, %21 : vector<48x128xf32>
    %c0_12 = arith.constant 0 : index
    %c0_13 = arith.constant 0 : index
    %23 = vector.load %arg9[%c0_12, %c0_13] : memref<48x1xf32, #tpu.memory_space<vmem>>, vector<48x1xf32>
    %24 = vector.broadcast %23 : vector<48x1xf32> to vector<48x128xf32>
    %25 = arith.mulf %22, %24 : vector<48x128xf32>
    %cst = arith.constant dense<0.000000e+00> : vector<128xf32>
    %26 = vector.multi_reduction <add>, %25, %cst [0] : vector<48x128xf32> to vector<128xf32>
    %27 = vector.shape_cast %26 : vector<128xf32> to vector<1x128xf32>
    %cst_14 = arith.constant 0.0217391308 : f32
    %28 = vector.broadcast %cst_14 : f32 to vector<1x128xf32>
    %29 = arith.mulf %27, %28 : vector<1x128xf32>
    %30 = vector.broadcast %29 : vector<1x128xf32> to vector<48x128xf32>
    %31 = arith.subf %22, %30 : vector<48x128xf32>
    %32 = vector.broadcast %23 : vector<48x1xf32> to vector<48x128xf32>
    %33 = arith.mulf %31, %32 : vector<48x128xf32>
    %34 = arith.mulf %33, %33 : vector<48x128xf32>
    %cst_15 = arith.constant dense<0.000000e+00> : vector<128xf32>
    %35 = vector.multi_reduction <add>, %34, %cst_15 [0] : vector<48x128xf32> to vector<128xf32>
    %36 = vector.shape_cast %35 : vector<128xf32> to vector<1x128xf32>
    %cst_16 = arith.constant 0.0217391308 : f32
    %37 = vector.broadcast %cst_16 : f32 to vector<1x128xf32>
    %38 = arith.mulf %36, %37 : vector<1x128xf32>
    %c0_17 = arith.constant 0 : index
    %c0_18 = arith.constant 0 : index
    %39 = vector.load %arg4[%c0_17, %c0_18] : memref<1x128xf32, #tpu.memory_space<vmem>>, vector<1x128xf32>
    %cst_19 = arith.constant 9.99999974E-6 : f32
    %40 = vector.broadcast %cst_19 : f32 to vector<1x128xf32>
    %41 = arith.addf %38, %40 : vector<1x128xf32>
    %42 = math.rsqrt %41 : vector<1x128xf32>
    %43 = arith.mulf %39, %42 : vector<1x128xf32>
    %c0_20 = arith.constant 0 : index
    %c0_21 = arith.constant 0 : index
    %44 = vector.load %arg5[%c0_20, %c0_21] : memref<1x128xf32, #tpu.memory_space<vmem>>, vector<1x128xf32>
    %45 = arith.mulf %29, %43 : vector<1x128xf32>
    %46 = arith.subf %44, %45 : vector<1x128xf32>
    %47 = vector.broadcast %43 : vector<1x128xf32> to vector<48x128xf32>
    %48 = arith.mulf %22, %47 : vector<48x128xf32>
    %49 = vector.broadcast %46 : vector<1x128xf32> to vector<48x128xf32>
    %50 = arith.addf %48, %49 : vector<48x128xf32>
    %cst_22 = arith.constant 2.000000e-01 : f32
    %51 = vector.broadcast %cst_22 : f32 to vector<48x128xf32>
    %52 = arith.mulf %51, %50 : vector<48x128xf32>
    %53 = arith.maximumf %50, %52 : vector<48x128xf32>
    %cst_23 = arith.constant 0.000000e+00 : f32
    %54 = vector.broadcast %cst_23 : f32 to vector<8x128xf32>
    %c48 = arith.constant 48 : index
    %c0_24 = arith.constant 0 : index
    %55 = vector.load %arg12[%c48, %c0_24] : memref<56x128xf32, #tpu.memory_space<vmem>>, vector<8x128xf32>
    tpu.vector_store %arg12[%c48, %c0_24], %54 {strides = array<i32>} : memref<56x128xf32, #tpu.memory_space<vmem>>, vector<8x128xf32>,
    %c0_25 = arith.constant 0 : index
    %c0_26 = arith.constant 0 : index
    %56 = vector.load %arg12[%c0_25, %c0_26] : memref<56x128xf32, #tpu.memory_space<vmem>>, vector<48x128xf32>
    tpu.vector_store %arg12[%c0_25, %c0_26], %53 {strides = array<i32>} : memref<56x128xf32, #tpu.memory_space<vmem>>, vector<48x128xf32>,
    %c0_27 = arith.constant 0 : index
    %c0_28 = arith.constant 0 : index
    %57 = tpu.strided_load %arg12[%c0_27, %c0_28] {strides = array<i32: 2, 1>} : memref<56x128xf32, #tpu.memory_space<vmem>>, vector<24x128xf32>
    %58 = arith.truncf %57 : vector<24x128xf32> to vector<24x128xbf16>
    %c0_29 = arith.constant 0 : index
    %c0_30 = arith.constant 0 : index
    %c0_31 = arith.constant 0 : index
    %59 = vector.load %arg2[%c0_29, %c0_30, %c0_31] : memref<4x128x128xbf16, #tpu.memory_space<vmem>>, vector<1x128x128xbf16>
    %60 = vector.shape_cast %59 : vector<1x128x128xbf16> to vector<128x128xbf16>
    %cst_32 = arith.constant dense<0.000000e+00> : vector<24x128xf32>
    %61 = tpu.matmul %58, %60, %cst_32 {dimension_numbers = #tpu.dot_dimension_numbers<[1], [0], [0], [1], [0, 0, 1, 1], [], []>} : vector<24x128xbf16>, vector<128x128xbf16>, vector<24x128xf32> -> vector<24x128xf32>
    %c1_33 = arith.constant 1 : index
    %c0_34 = arith.constant 0 : index
    %62 = tpu.strided_load %arg12[%c1_33, %c0_34] {strides = array<i32: 2, 1>} : memref<56x128xf32, #tpu.memory_space<vmem>>, vector<24x128xf32>
    %63 = arith.truncf %62 : vector<24x128xf32> to vector<24x128xbf16>
    %c1_35 = arith.constant 1 : index
    %c0_36 = arith.constant 0 : index
    %c0_37 = arith.constant 0 : index
    %64 = vector.load %arg2[%c1_35, %c0_36, %c0_37] : memref<4x128x128xbf16, #tpu.memory_space<vmem>>, vector<1x128x128xbf16>
    %65 = vector.shape_cast %64 : vector<1x128x128xbf16> to vector<128x128xbf16>
    %cst_38 = arith.constant dense<0.000000e+00> : vector<24x128xf32>
    %66 = tpu.matmul %63, %65, %cst_38 {dimension_numbers = #tpu.dot_dimension_numbers<[1], [0], [0], [1], [0, 0, 1, 1], [], []>} : vector<24x128xbf16>, vector<128x128xbf16>, vector<24x128xf32> -> vector<24x128xf32>
    %67 = arith.addf %61, %66 : vector<24x128xf32>
    %c2_39 = arith.constant 2 : index
    %c0_40 = arith.constant 0 : index
    %68 = tpu.strided_load %arg12[%c2_39, %c0_40] {strides = array<i32: 2, 1>} : memref<56x128xf32, #tpu.memory_space<vmem>>, vector<24x128xf32>
    %69 = arith.truncf %68 : vector<24x128xf32> to vector<24x128xbf16>
    %c2_41 = arith.constant 2 : index
    %c0_42 = arith.constant 0 : index
    %c0_43 = arith.constant 0 : index
    %70 = vector.load %arg2[%c2_41, %c0_42, %c0_43] : memref<4x128x128xbf16, #tpu.memory_space<vmem>>, vector<1x128x128xbf16>
    %71 = vector.shape_cast %70 : vector<1x128x128xbf16> to vector<128x128xbf16>
    %cst_44 = arith.constant dense<0.000000e+00> : vector<24x128xf32>
    %72 = tpu.matmul %69, %71, %cst_44 {dimension_numbers = #tpu.dot_dimension_numbers<[1], [0], [0], [1], [0, 0, 1, 1], [], []>} : vector<24x128xbf16>, vector<128x128xbf16>, vector<24x128xf32> -> vector<24x128xf32>
    %73 = arith.addf %67, %72 : vector<24x128xf32>
    %c3_45 = arith.constant 3 : index
    %c0_46 = arith.constant 0 : index
    %74 = tpu.strided_load %arg12[%c3_45, %c0_46] {strides = array<i32: 2, 1>} : memref<56x128xf32, #tpu.memory_space<vmem>>, vector<24x128xf32>
    %75 = arith.truncf %74 : vector<24x128xf32> to vector<24x128xbf16>
    %c3_47 = arith.constant 3 : index
    %c0_48 = arith.constant 0 : index
    %c0_49 = arith.constant 0 : index
    %76 = vector.load %arg2[%c3_47, %c0_48, %c0_49] : memref<4x128x128xbf16, #tpu.memory_space<vmem>>, vector<1x128x128xbf16>
    %77 = vector.shape_cast %76 : vector<1x128x128xbf16> to vector<128x128xbf16>
    %cst_50 = arith.constant dense<0.000000e+00> : vector<24x128xf32>
    %78 = tpu.matmul %75, %77, %cst_50 {dimension_numbers = #tpu.dot_dimension_numbers<[1], [0], [0], [1], [0, 0, 1, 1], [], []>} : vector<24x128xbf16>, vector<128x128xbf16>, vector<24x128xf32> -> vector<24x128xf32>
    %79 = arith.addf %73, %78 : vector<24x128xf32>
    %c0_51 = arith.constant 0 : index
    %c0_52 = arith.constant 0 : index
    %80 = vector.load %arg10[%c0_51, %c0_52] : memref<24x1xf32, #tpu.memory_space<vmem>>, vector<24x1xf32>
    %81 = vector.broadcast %80 : vector<24x1xf32> to vector<24x128xf32>
    %82 = arith.mulf %79, %81 : vector<24x128xf32>
    %cst_53 = arith.constant dense<0.000000e+00> : vector<128xf32>
    %83 = vector.multi_reduction <add>, %82, %cst_53 [0] : vector<24x128xf32> to vector<128xf32>
    %84 = vector.shape_cast %83 : vector<128xf32> to vector<1x128xf32>
    %cst_54 = arith.constant 5.000000e-02 : f32
    %85 = vector.broadcast %cst_54 : f32 to vector<1x128xf32>
    %86 = arith.mulf %84, %85 : vector<1x128xf32>
    %87 = vector.broadcast %86 : vector<1x128xf32> to vector<24x128xf32>
    %88 = arith.subf %79, %87 : vector<24x128xf32>
    %89 = vector.broadcast %80 : vector<24x1xf32> to vector<24x128xf32>
    %90 = arith.mulf %88, %89 : vector<24x128xf32>
    %91 = arith.mulf %90, %90 : vector<24x128xf32>
    %cst_55 = arith.constant dense<0.000000e+00> : vector<128xf32>
    %92 = vector.multi_reduction <add>, %91, %cst_55 [0] : vector<24x128xf32> to vector<128xf32>
    %93 = vector.shape_cast %92 : vector<128xf32> to vector<1x128xf32>
    %cst_56 = arith.constant 5.000000e-02 : f32
    %94 = vector.broadcast %cst_56 : f32 to vector<1x128xf32>
    %95 = arith.mulf %93, %94 : vector<1x128xf32>
    %c0_57 = arith.constant 0 : index
    %c0_58 = arith.constant 0 : index
    %96 = vector.load %arg6[%c0_57, %c0_58] : memref<1x128xf32, #tpu.memory_space<vmem>>, vector<1x128xf32>
    %cst_59 = arith.constant 9.99999974E-6 : f32
    %97 = vector.broadcast %cst_59 : f32 to vector<1x128xf32>
    %98 = arith.addf %95, %97 : vector<1x128xf32>
    %99 = math.rsqrt %98 : vector<1x128xf32>
    %100 = arith.mulf %96, %99 : vector<1x128xf32>
    %c0_60 = arith.constant 0 : index
    %c0_61 = arith.constant 0 : index
    %101 = vector.load %arg7[%c0_60, %c0_61] : memref<1x128xf32, #tpu.memory_space<vmem>>, vector<1x128xf32>
    %102 = arith.mulf %86, %100 : vector<1x128xf32>
    %103 = arith.subf %101, %102 : vector<1x128xf32>
    %104 = vector.broadcast %100 : vector<1x128xf32> to vector<24x128xf32>
    %105 = arith.mulf %79, %104 : vector<24x128xf32>
    %106 = vector.broadcast %103 : vector<1x128xf32> to vector<24x128xf32>
    %107 = arith.addf %105, %106 : vector<24x128xf32>
    %cst_62 = arith.constant 2.000000e-01 : f32
    %108 = vector.broadcast %cst_62 : f32 to vector<24x128xf32>
    %109 = arith.mulf %108, %107 : vector<24x128xf32>
    %110 = arith.maximumf %107, %109 : vector<24x128xf32>
    %cst_63 = arith.constant 0.000000e+00 : f32
    %111 = vector.broadcast %cst_63 : f32 to vector<8x128xf32>
    %c24 = arith.constant 24 : index
    %c0_64 = arith.constant 0 : index
    %112 = vector.load %arg13[%c24, %c0_64] : memref<32x128xf32, #tpu.memory_space<vmem>>, vector<8x128xf32>
    tpu.vector_store %arg13[%c24, %c0_64], %111 {strides = array<i32>} : memref<32x128xf32, #tpu.memory_space<vmem>>, vector<8x128xf32>,
    %c0_65 = arith.constant 0 : index
    %c0_66 = arith.constant 0 : index
    %113 = vector.load %arg13[%c0_65, %c0_66] : memref<32x128xf32, #tpu.memory_space<vmem>>, vector<24x128xf32>
    tpu.vector_store %arg13[%c0_65, %c0_66], %110 {strides = array<i32>} : memref<32x128xf32, #tpu.memory_space<vmem>>, vector<24x128xf32>,
    %c0_67 = arith.constant 0 : index
    %c0_68 = arith.constant 0 : index
    %114 = tpu.strided_load %arg13[%c0_67, %c0_68] {strides = array<i32: 2, 1>} : memref<32x128xf32, #tpu.memory_space<vmem>>, vector<12x128xf32>
    %115 = arith.truncf %114 : vector<12x128xf32> to vector<12x128xbf16>
    %c0_69 = arith.constant 0 : index
    %c0_70 = arith.constant 0 : index
    %c0_71 = arith.constant 0 : index
    %116 = vector.load %arg3[%c0_69, %c0_70, %c0_71] : memref<4x128x128xbf16, #tpu.memory_space<vmem>>, vector<1x128x128xbf16>
    %117 = vector.shape_cast %116 : vector<1x128x128xbf16> to vector<128x128xbf16>
    %cst_72 = arith.constant dense<0.000000e+00> : vector<12x128xf32>
    %118 = tpu.matmul %115, %117, %cst_72 {dimension_numbers = #tpu.dot_dimension_numbers<[1], [0], [0], [1], [0, 0, 1, 1], [], []>} : vector<12x128xbf16>, vector<128x128xbf16>, vector<12x128xf32> -> vector<12x128xf32>
    %c1_73 = arith.constant 1 : index
    %c0_74 = arith.constant 0 : index
    %119 = tpu.strided_load %arg13[%c1_73, %c0_74] {strides = array<i32: 2, 1>} : memref<32x128xf32, #tpu.memory_space<vmem>>, vector<12x128xf32>
    %120 = arith.truncf %119 : vector<12x128xf32> to vector<12x128xbf16>
    %c1_75 = arith.constant 1 : index
    %c0_76 = arith.constant 0 : index
    %c0_77 = arith.constant 0 : index
    %121 = vector.load %arg3[%c1_75, %c0_76, %c0_77] : memref<4x128x128xbf16, #tpu.memory_space<vmem>>, vector<1x128x128xbf16>
    %122 = vector.shape_cast %121 : vector<1x128x128xbf16> to vector<128x128xbf16>
    %cst_78 = arith.constant dense<0.000000e+00> : vector<12x128xf32>
    %123 = tpu.matmul %120, %122, %cst_78 {dimension_numbers = #tpu.dot_dimension_numbers<[1], [0], [0], [1], [0, 0, 1, 1], [], []>} : vector<12x128xbf16>, vector<128x128xbf16>, vector<12x128xf32> -> vector<12x128xf32>
    %124 = arith.addf %118, %123 : vector<12x128xf32>
    %c2_79 = arith.constant 2 : index
    %c0_80 = arith.constant 0 : index
    %125 = tpu.strided_load %arg13[%c2_79, %c0_80] {strides = array<i32: 2, 1>} : memref<32x128xf32, #tpu.memory_space<vmem>>, vector<12x128xf32>
    %126 = arith.truncf %125 : vector<12x128xf32> to vector<12x128xbf16>
    %c2_81 = arith.constant 2 : index
    %c0_82 = arith.constant 0 : index
    %c0_83 = arith.constant 0 : index
    %127 = vector.load %arg3[%c2_81, %c0_82, %c0_83] : memref<4x128x128xbf16, #tpu.memory_space<vmem>>, vector<1x128x128xbf16>
    %128 = vector.shape_cast %127 : vector<1x128x128xbf16> to vector<128x128xbf16>
    %cst_84 = arith.constant dense<0.000000e+00> : vector<12x128xf32>
    %129 = tpu.matmul %126, %128, %cst_84 {dimension_numbers = #tpu.dot_dimension_numbers<[1], [0], [0], [1], [0, 0, 1, 1], [], []>} : vector<12x128xbf16>, vector<128x128xbf16>, vector<12x128xf32> -> vector<12x128xf32>
    %130 = arith.addf %124, %129 : vector<12x128xf32>
    %c3_85 = arith.constant 3 : index
    %c0_86 = arith.constant 0 : index
    %131 = tpu.strided_load %arg13[%c3_85, %c0_86] {strides = array<i32: 2, 1>} : memref<32x128xf32, #tpu.memory_space<vmem>>, vector<12x128xf32>
    %132 = arith.truncf %131 : vector<12x128xf32> to vector<12x128xbf16>
    %c3_87 = arith.constant 3 : index
    %c0_88 = arith.constant 0 : index
    %c0_89 = arith.constant 0 : index
    %133 = vector.load %arg3[%c3_87, %c0_88, %c0_89] : memref<4x128x128xbf16, #tpu.memory_space<vmem>>, vector<1x128x128xbf16>
    %134 = vector.shape_cast %133 : vector<1x128x128xbf16> to vector<128x128xbf16>
    %cst_90 = arith.constant dense<0.000000e+00> : vector<12x128xf32>
    %135 = tpu.matmul %132, %134, %cst_90 {dimension_numbers = #tpu.dot_dimension_numbers<[1], [0], [0], [1], [0, 0, 1, 1], [], []>} : vector<12x128xbf16>, vector<128x128xbf16>, vector<12x128xf32> -> vector<12x128xf32>
    %136 = arith.addf %130, %135 : vector<12x128xf32>
    %c0_91 = arith.constant 0 : index
    %c0_92 = arith.constant 0 : index
    %137 = vector.load %arg8[%c0_91, %c0_92] : memref<1x128xf32, #tpu.memory_space<vmem>>, vector<1x128xf32>
    %138 = vector.broadcast %137 : vector<1x128xf32> to vector<12x128xf32>
    %139 = arith.addf %136, %138 : vector<12x128xf32>
    %c0_93 = arith.constant 0 : index
    %c0_94 = arith.constant 0 : index
    %140 = vector.load %arg11[%c0_93, %c0_94] : memref<12x128xf32, #tpu.memory_space<vmem>>, vector<12x128xf32>
    tpu.vector_store %arg11[%c0_93, %c0_94], %139 {strides = array<i32>} : memref<12x128xf32, #tpu.memory_space<vmem>>, vector<12x128xf32>,
    return
  }
}

</mosaic_0001>

<llo_original>
// kernel: tile.13
$region0: #{tile.13}
  #allocation0 [shape = 's32[1]{0}', space=sflag, size = 0x4, scoped, tag = 'scoped memory for tile.13']
  %s0 = inlined_call_operand.vmem [shape: f32[24], index: 0, kind: input, shape index: {}]
  %s1 = inlined_call_operand.vmem [shape: f32[2,24], index: 1, kind: output, shape index: {}]
  // Predicated region
  $region2: #{tile.13} parent=0 // pred_check
    _
  $region3: #{tile.13} parent=0 // pred_check_branch
    %3 = sbr.rel (0) target = $region5
  $region4: #{tile.13} parent=0 // pred_region
    _
  $region5: #{tile.13} parent=0 // pred_fallthru
    _
  %v4 = vld [vmem:[%s0] ss:$0 sm:$0xff]
  %5 = vst [vmem:[%s1] sm:$0x3] %v4

// kernel: tile.0
$region0: #{tile.0}
  %s0 = inlined_call_operand.vmem [shape: f32[2,24], index: 0, kind: input, shape index: {}]
  %s1 = inlined_call_operand.vmem [shape: f32[48,1], index: 1, kind: output, shape index: {}]
  $region1: #{tile.0} parent=0
    #allocation0 [shape = 'u8[4096]{0}', space=vmem, size = 0x1000, scoped, tag = 'scoped mem for input reshape']
    %s3 = sshllo.u32 0, 2
    %v4 = vld [vmem:[%s0] sm:%s3]
    %5 = vst [vmem:[#allocation0] sm:%s3] %v4
    %v6 = vld [vmem:[#allocation0] sm:$0x3]
    %vm7 = vcmask 7168
    %8 = vst.msk [vmem:[%s1] ss:$24 sm:$0x3] %vm7, %v6
    %v9 = vld [vmem:[#allocation0] sm:$0x3]
    %10 = vrot.lane.b32.xlu0 %v9, 127
    %v11 = vpop.permute.xlu0 %10
    %vm12 = vcmask 7168
    %s13 = scalar_lea.vmem %s1, 1
    %14 = vst.msk [vmem:[%s13] ss:$24 sm:$0x3] %vm12, %v11
    %v15 = vld [vmem:[#allocation0] sm:$0x3]
    %16 = vrot.lane.b32.xlu0 %v15, 126
    %v17 = vpop.permute.xlu0 %16
    %vm18 = vcmask 7168
    %s19 = scalar_lea.vmem %s1, 2
    %20 = vst.msk [vmem:[%s19] ss:$24 sm:$0x3] %vm18, %v17
    %v21 = vld [vmem:[#allocation0] sm:$0x3]
    %22 = vrot.lane.b32.xlu0 %v21, 125
    %v23 = vpop.permute.xlu0 %22
    %vm24 = vcmask 7168
    %s25 = scalar_lea.vmem %s1, 3
    %26 = vst.msk [vmem:[%s25] ss:$24 sm:$0x3] %vm24, %v23
    %v27 = vld [vmem:[#allocation0] sm:$0x3]
    %28 = vrot.lane.b32.xlu0 %v27, 124
    %v29 = vpop.permute.xlu0 %28
    %vm30 = vcmask 7168
    %s31 = scalar_lea.vmem %s1, 4
    %32 = vst.msk [vmem:[%s31] ss:$24 sm:$0x3] %vm30, %v29
    %v33 = vld [vmem:[#allocation0] sm:$0x3]
    %34 = vrot.lane.b32.xlu0 %v33, 123
    %v35 = vpop.permute.xlu0 %34
    %vm36 = vcmask 7168
    %s37 = scalar_lea.vmem %s1, 5
    %38 = vst.msk [vmem:[%s37] ss:$24 sm:$0x3] %vm36, %v35
    %v39 = vld [vmem:[#allocation0] sm:$0x3]
    %40 = vrot.lane.b32.xlu0 %v39, 122
    %v41 = vpop.permute.xlu0 %40
    %vm42 = vcmask 7168
    %s43 = scalar_lea.vmem %s1, 6
    %44 = vst.msk [vmem:[%s43] ss:$24 sm:$0x3] %vm42, %v41
    %v45 = vld [vmem:[#allocation0] sm:$0x3]
    %46 = vrot.lane.b32.xlu0 %v45, 121
    %v47 = vpop.permute.xlu0 %46
    %vm48 = vcmask 7168
    %s49 = scalar_lea.vmem %s1, 7
    %50 = vst.msk [vmem:[%s49] ss:$24 sm:$0x3] %vm48, %v47
    %s51 = scalar_lea.vmem [#allocation0], 1
    %s52 = smov 3
    %v53 = vld [vmem:[%s51] ss:$-1 sm:%s52]
    %54 = vrot.lane.b32.xlu0 %v53, 120
    %v55 = vpop.permute.xlu0 %54
    %vm56 = vcmask 7168
    %s57 = scalar_lea.vmem %s1, 32
    %58 = vst.msk [vmem:[%s57] ss:$-24 sm:$0x3] %vm56, %v55
    %s59 = scalar_lea.vmem [#allocation0], 1
    %s60 = smov 3
    %v61 = vld [vmem:[%s59] ss:$-1 sm:%s60]
    %62 = vrot.lane.b32.xlu0 %v61, 119
    %v63 = vpop.permute.xlu0 %62
    %vm64 = vcmask 7168
    %s65 = scalar_lea.vmem %s1, 33
    %66 = vst.msk [vmem:[%s65] ss:$-24 sm:$0x3] %vm64, %v63
    %s67 = scalar_lea.vmem [#allocation0], 1
    %s68 = smov 3
    %v69 = vld [vmem:[%s67] ss:$-1 sm:%s68]
    %70 = vrot.lane.b32.xlu0 %v69, 118
    %v71 = vpop.permute.xlu0 %70
    %vm72 = vcmask 7168
    %s73 = scalar_lea.vmem %s1, 34
    %74 = vst.msk [vmem:[%s73] ss:$-24 sm:$0x3] %vm72, %v71
    %s75 = scalar_lea.vmem [#allocation0], 1
    %s76 = smov 3
    %v77 = vld [vmem:[%s75] ss:$-1 sm:%s76]
    %78 = vrot.lane.b32.xlu0 %v77, 117
    %v79 = vpop.permute.xlu0 %78
    %vm80 = vcmask 7168
    %s81 = scalar_lea.vmem %s1, 35
    %82 = vst.msk [vmem:[%s81] ss:$-24 sm:$0x3] %vm80, %v79
    %s83 = scalar_lea.vmem [#allocation0], 1
    %s84 = smov 3
    %v85 = vld [vmem:[%s83] ss:$-1 sm:%s84]
    %86 = vrot.lane.b32.xlu0 %v85, 116
    %v87 = vpop.permute.xlu0 %86
    %vm88 = vcmask 7168
    %s89 = scalar_lea.vmem %s1, 36
    %90 = vst.msk [vmem:[%s89] ss:$-24 sm:$0x3] %vm88, %v87
    %s91 = scalar_lea.vmem [#allocation0], 1
    %s92 = smov 3
    %v93 = vld [vmem:[%s91] ss:$-1 sm:%s92]
    %94 = vrot.lane.b32.xlu0 %v93, 115
    %v95 = vpop.permute.xlu0 %94
    %vm96 = vcmask 7168
    %s97 = scalar_lea.vmem %s1, 37
    %98 = vst.msk [vmem:[%s97] ss:$-24 sm:$0x3] %vm96, %v95
    %s99 = scalar_lea.vmem [#allocation0], 1
    %s100 = smov 3
    %v101 = vld [vmem:[%s99] ss:$-1 sm:%s100]
    %102 = vrot.lane.b32.xlu0 %v101, 114
    %v103 = vpop.permute.xlu0 %102
    %vm104 = vcmask 7168
    %s105 = scalar_lea.vmem %s1, 38
    %106 = vst.msk [vmem:[%s105] ss:$-24 sm:$0x3] %vm104, %v103
    %s107 = scalar_lea.vmem [#allocation0], 1
    %s108 = smov 3
    %v109 = vld [vmem:[%s107] ss:$-1 sm:%s108]
    %110 = vrot.lane.b32.xlu0 %v109, 113
    %v111 = vpop.permute.xlu0 %110
    %vm112 = vcmask 7168
    %s113 = scalar_lea.vmem %s1, 39
    %114 = vst.msk [vmem:[%s113] ss:$-24 sm:$0x3] %vm112, %v111
    %s115 = scalar_lea.vmem [#allocation0], 1
    %s116 = smov 3
    %v117 = vld [vmem:[%s115] ss:$-1 sm:%s116]
    %118 = vrot.lane.b32.xlu0 %v117, 112
    %v119 = vpop.permute.xlu0 %118
    %vm120 = vcmask 7168
    %s121 = scalar_lea.vmem %s1, 40
    %122 = vst.msk [vmem:[%s121] ss:$-24 sm:$0x3] %vm120, %v119
    %s123 = scalar_lea.vmem [#allocation0], 1
    %s124 = smov 3
    %v125 = vld [vmem:[%s123] ss:$-1 sm:%s124]
    %126 = vrot.lane.b32.xlu0 %v125, 111
    %v127 = vpop.permute.xlu0 %126
    %vm128 = vcmask 7168
    %s129 = scalar_lea.vmem %s1, 41
    %130 = vst.msk [vmem:[%s129] ss:$-24 sm:$0x3] %vm128, %v127
    %s131 = scalar_lea.vmem [#allocation0], 1
    %s132 = smov 3
    %v133 = vld [vmem:[%s131] ss:$-1 sm:%s132]
    %134 = vrot.lane.b32.xlu0 %v133, 110
    %v135 = vpop.permute.xlu0 %134
    %vm136 = vcmask 7168
    %s137 = scalar_lea.vmem %s1, 42
    %138 = vst.msk [vmem:[%s137] ss:$-24 sm:$0x3] %vm136, %v135
    %s139 = scalar_lea.vmem [#allocation0], 1
    %s140 = smov 3
    %v141 = vld [vmem:[%s139] ss:$-1 sm:%s140]
    %142 = vrot.lane.b32.xlu0 %v141, 109
    %v143 = vpop.permute.xlu0 %142
    %vm144 = vcmask 7168
    %s145 = scalar_lea.vmem %s1, 43
    %146 = vst.msk [vmem:[%s145] ss:$-24 sm:$0x3] %vm144, %v143
    %s147 = scalar_lea.vmem [#allocation0], 1
    %s148 = smov 3
    %v149 = vld [vmem:[%s147] ss:$-1 sm:%s148]
    %150 = vrot.lane.b32.xlu0 %v149, 108
    %v151 = vpop.permute.xlu0 %150
    %vm152 = vcmask 7168
    %s153 = scalar_lea.vmem %s1, 44
    %154 = vst.msk [vmem:[%s153] ss:$-24 sm:$0x3] %vm152, %v151
    %s155 = scalar_lea.vmem [#allocation0], 1
    %s156 = smov 3
    %v157 = vld [vmem:[%s155] ss:$-1 sm:%s156]
    %158 = vrot.lane.b32.xlu0 %v157, 107
    %v159 = vpop.permute.xlu0 %158
    %vm160 = vcmask 7168
    %s161 = scalar_lea.vmem %s1, 45
    %162 = vst.msk [vmem:[%s161] ss:$-24 sm:$0x3] %vm160, %v159
    %s163 = scalar_lea.vmem [#allocation0], 1
    %s164 = smov 3
    %v165 = vld [vmem:[%s163] ss:$-1 sm:%s164]
    %166 = vrot.lane.b32.xlu0 %v165, 106
    %v167 = vpop.permute.xlu0 %166
    %vm168 = vcmask 7168
    %s169 = scalar_lea.vmem %s1, 46
    %170 = vst.msk [vmem:[%s169] ss:$-24 sm:$0x3] %vm168, %v167
    %s171 = scalar_lea.vmem [#allocation0], 1
    %s172 = smov 3
    %v173 = vld [vmem:[%s171] ss:$-1 sm:%s172]
    %174 = vrot.lane.b32.xlu0 %v173, 105
    %v175 = vpop.permute.xlu0 %174
    %vm176 = vcmask 7168
    %s177 = scalar_lea.vmem %s1, 47
    %178 = vst.msk [vmem:[%s177] ss:$-24 sm:$0x3] %vm176, %v175

// kernel: tile.1
$region0: #{tile.1}
  %s0 = inlined_call_operand.vmem [shape: f32[2,12], index: 0, kind: input, shape index: {}]
  %s1 = inlined_call_operand.vmem [shape: f32[24,1], index: 1, kind: output, shape index: {}]
  $region1: #{tile.1} parent=0
    #allocation0 [shape = 'u8[4096]{0}', space=vmem, size = 0x1000, scoped, tag = 'scoped mem for input reshape']
    %s3 = sshllo.u32 0, 2
    %v4 = vld [vmem:[%s0] sm:%s3]
    %5 = vst [vmem:[#allocation0] sm:%s3] %v4
    %v6 = vld [vmem:[#allocation0] sm:$0x3]
    %vm7 = vcmask 7168
    %8 = vst.msk [vmem:[%s1] ss:$12 sm:$0x3] %vm7, %v6
    %v9 = vld [vmem:[#allocation0] sm:$0x3]
    %10 = vrot.lane.b32.xlu0 %v9, 127
    %v11 = vpop.permute.xlu0 %10
    %vm12 = vcmask 7168
    %s13 = scalar_lea.vmem %s1, 1
    %14 = vst.msk [vmem:[%s13] ss:$12 sm:$0x3] %vm12, %v11
    %v15 = vld [vmem:[#allocation0] sm:$0x3]
    %16 = vrot.lane.b32.xlu0 %v15, 126
    %v17 = vpop.permute.xlu0 %16
    %vm18 = vcmask 7168
    %s19 = scalar_lea.vmem %s1, 2
    %20 = vst.msk [vmem:[%s19] ss:$12 sm:$0x3] %vm18, %v17
    %v21 = vld [vmem:[#allocation0] sm:$0x3]
    %22 = vrot.lane.b32.xlu0 %v21, 125
    %v23 = vpop.permute.xlu0 %22
    %vm24 = vcmask 7168
    %s25 = scalar_lea.vmem %s1, 3
    %26 = vst.msk [vmem:[%s25] ss:$12 sm:$0x3] %vm24, %v23
    %v27 = vld [vmem:[#allocation0] sm:$0x3]
    %28 = vrot.lane.b32.xlu0 %v27, 124
    %v29 = vpop.permute.xlu0 %28
    %vm30 = vcmask 7168
    %s31 = scalar_lea.vmem %s1, 4
    %32 = vst.msk [vmem:[%s31] ss:$12 sm:$0x3] %vm30, %v29
    %v33 = vld [vmem:[#allocation0] sm:$0x3]
    %34 = vrot.lane.b32.xlu0 %v33, 123
    %v35 = vpop.permute.xlu0 %34
    %vm36 = vcmask 7168
    %s37 = scalar_lea.vmem %s1, 5
    %38 = vst.msk [vmem:[%s37] ss:$12 sm:$0x3] %vm36, %v35
    %v39 = vld [vmem:[#allocation0] sm:$0x3]
    %40 = vrot.lane.b32.xlu0 %v39, 122
    %v41 = vpop.permute.xlu0 %40
    %vm42 = vcmask 7168
    %s43 = scalar_lea.vmem %s1, 6
    %44 = vst.msk [vmem:[%s43] ss:$12 sm:$0x3] %vm42, %v41
    %v45 = vld [vmem:[#allocation0] sm:$0x3]
    %46 = vrot.lane.b32.xlu0 %v45, 121
    %v47 = vpop.permute.xlu0 %46
    %vm48 = vcmask 7168
    %s49 = scalar_lea.vmem %s1, 7
    %50 = vst.msk [vmem:[%s49] ss:$12 sm:$0x3] %vm48, %v47
    %v51 = vld [vmem:[#allocation0] sm:$0x3]
    %52 = vrot.lane.b32.xlu0 %v51, 120
    %v53 = vpop.permute.xlu0 %52
    %vm54 = vcmask 7168
    %s55 = scalar_lea.vmem %s1, 8
    %56 = vst.msk [vmem:[%s55] ss:$12 sm:$0x3] %vm54, %v53
    %v57 = vld [vmem:[#allocation0] sm:$0x3]
    %58 = vrot.lane.b32.xlu0 %v57, 119
    %v59 = vpop.permute.xlu0 %58
    %vm60 = vcmask 7168
    %s61 = scalar_lea.vmem %s1, 9
    %62 = vst.msk [vmem:[%s61] ss:$12 sm:$0x3] %vm60, %v59
    %v63 = vld [vmem:[#allocation0] sm:$0x3]
    %64 = vrot.lane.b32.xlu0 %v63, 118
    %v65 = vpop.permute.xlu0 %64
    %vm66 = vcmask 7168
    %s67 = scalar_lea.vmem %s1, 10
    %68 = vst.msk [vmem:[%s67] ss:$12 sm:$0x3] %vm66, %v65
    %v69 = vld [vmem:[#allocation0] sm:$0x3]
    %70 = vrot.lane.b32.xlu0 %v69, 117
    %v71 = vpop.permute.xlu0 %70
    %vm72 = vcmask 7168
    %s73 = scalar_lea.vmem %s1, 11
    %74 = vst.msk [vmem:[%s73] ss:$12 sm:$0x3] %vm72, %v71

// kernel: tile.18
$region0: #{tile.18}
  #allocation0 [shape = 's32[1]{0}', space=sflag, size = 0x4, scoped, tag = 'scoped memory for tile.18']
  %s0 = inlined_call_operand.vmem [shape: f32[12], index: 0, kind: input, shape index: {}]
  %s1 = inlined_call_operand.vmem [shape: f32[2,12], index: 1, kind: output, shape index: {}]
  // Predicated region
  $region2: #{tile.18} parent=0 // pred_check
    _
  $region3: #{tile.18} parent=0 // pred_check_branch
    %3 = sbr.rel (0) target = $region5
  $region4: #{tile.18} parent=0 // pred_region
    _
  $region5: #{tile.18} parent=0 // pred_fallthru
    _
  %v4 = vld [vmem:[%s0] ss:$0 sm:$0xff]
  %5 = vst [vmem:[%s1] sm:$0x3] %v4

// kernel: critic_forward.1
$region0: #{critic_forward.1}
  #allocation0 [shape = 'u32[]', space=smem, size = 0x4, offset = 0x4, fixed_abs, tag = 'smem constant byte address 0x4 - core index']
  #allocation1 [shape = 'u32[144,128]{1,0:T(1,128)}', space=vmem, size = 0x12000, scoped, tag = 'internal scratch']
  #allocation2 [shape = 'f32[56,128]{1,0:T(8,128)}', space=vmem, size = 0x7000, scoped, tag = 'scratch operand']
  #allocation3 [shape = 'f32[32,128]{1,0:T(8,128)}', space=vmem, size = 0x4000, scoped, tag = 'scratch operand']
  %s0 = inlined_call_operand.vmem [shape: f32[104,1], index: 0, kind: input, shape index: {}]
  %s1 = inlined_call_operand.vmem [shape: f32[4,128], index: 1, kind: input, shape index: {}]
  %s2 = inlined_call_operand.vmem [shape: bf16[4,128,128], index: 2, kind: input, shape index: {}]
  %s3 = inlined_call_operand.hbm [shape: bf16[4,128,128], index: 3, kind: input, shape index: {}]
  %s4 = inlined_call_operand.vmem [shape: f32[1,128], index: 4, kind: input, shape index: {}]
  %s5 = inlined_call_operand.vmem [shape: f32[1,128], index: 5, kind: input, shape index: {}]
  %s6 = inlined_call_operand.vmem [shape: f32[1,128], index: 6, kind: input, shape index: {}]
  %s7 = inlined_call_operand.vmem [shape: f32[1,128], index: 7, kind: input, shape index: {}]
  %s8 = inlined_call_operand.vmem [shape: f32[1,128], index: 8, kind: input, shape index: {}]
  %s9 = inlined_call_operand.vmem [shape: f32[48,1], index: 9, kind: input, shape index: {}]
  %s10 = inlined_call_operand.vmem [shape: f32[24,1], index: 10, kind: input, shape index: {}]
  %s11 = inlined_call_operand.vmem [shape: f32[12,128], index: 11, kind: output, shape index: {}]
  %s12 = sld [smem:[#allocation0]]
  $region58: #{critic_forward.1} parent=0
    _
  %s14 = ssub.s32 1, %s12
  %s15 = scalar_select 0, %s14, %s12
  $region1: #{critic_forward.1} parent=0
    #allocation4 [shape = 'u8[131072]{0}', space=vmem, size = 0x20000, scoped, tag = 'input window, operand 3, single buffered']
    #allocation5 [shape = 's32[1]{0}', space=sflag, size = 0x4, scoped, tag = 'scoped memory for critic_forward.1']
    %16 = vsyncpa [#allocation5], 0
    // Predicated region
    $region2: #{critic_forward.1} parent=1 // pred_check
      _
    $region3: #{critic_forward.1} parent=1 // pred_check_branch
      %18 = sbr.rel (0) target = $region5
    $region4: #{critic_forward.1} parent=1 // pred_region
      _
    $region5: #{critic_forward.1} parent=1 // pred_fallthru
      _
    // Predicated region
    $region6: #{critic_forward.1} parent=1 // pred_check
      _
    $region7: #{critic_forward.1} parent=1 // pred_check_branch
      %20 = sbr.rel (0) target = $region9
    $region8: #{critic_forward.1} parent=1 // pred_region
      _
    $region9: #{critic_forward.1} parent=1 // pred_fallthru
      _
    // Predicated region
    $region10: #{critic_forward.1} parent=1 // pred_check
      _
    $region11: #{critic_forward.1} parent=1 // pred_check_branch
      %22 = sbr.rel (0) target = $region13
    $region12: #{critic_forward.1} parent=1 // pred_region
      _
    $region13: #{critic_forward.1} parent=1 // pred_fallthru
      _
    // Predicated region
    $region14: #{critic_forward.1} parent=1 // pred_check
      _
    $region15: #{critic_forward.1} parent=1 // pred_check_branch
      %24 = sbr.rel (0) target = $region17
    $region16: #{critic_forward.1} parent=1 // pred_region
      %s26 = ssub.s32 4096, 4096
      %27 = vsyncadd [#allocation5], %s26
      %s28 = sshll.u32 [#allocation4], 4
      %s29 = int_to_ptr.vmem [resolvable:$true] %s28
      %34 = dma.hbm_to_vmem [thread:$0]  %s3, 4096, %s29, [#allocation5], 64, 64, 4
    $region17: #{critic_forward.1} parent=1 // pred_fallthru
      _
    // Predicated region
    $region18: #{critic_forward.1} parent=1 // pred_check
      _
    $region19: #{critic_forward.1} parent=1 // pred_check_branch
      %36 = sbr.rel (0) target = $region21
    $region20: #{critic_forward.1} parent=1 // pred_region
      _
    $region21: #{critic_forward.1} parent=1 // pred_fallthru
      _
    // Predicated region
    $region22: #{critic_forward.1} parent=1 // pred_check
      _
    $region23: #{critic_forward.1} parent=1 // pred_check_branch
      %38 = sbr.rel (0) target = $region25
    $region24: #{critic_forward.1} parent=1 // pred_region
      _
    $region25: #{critic_forward.1} parent=1 // pred_fallthru
      _
    // Predicated region
    $region26: #{critic_forward.1} parent=1 // pred_check
      _
    $region27: #{critic_forward.1} parent=1 // pred_check_branch
      %40 = sbr.rel (0) target = $region29
    $region28: #{critic_forward.1} parent=1 // pred_region
      _
    $region29: #{critic_forward.1} parent=1 // pred_fallthru
      _
    // Predicated region
    $region30: #{critic_forward.1} parent=1 // pred_check
      _
    $region31: #{critic_forward.1} parent=1 // pred_check_branch
      %42 = sbr.rel (0) target = $region33
    $region32: #{critic_forward.1} parent=1 // pred_region
      _
    $region33: #{critic_forward.1} parent=1 // pred_fallthru
      _
    // Predicated region
    $region34: #{critic_forward.1} parent=1 // pred_check
      _
    $region35: #{critic_forward.1} parent=1 // pred_check_branch
      %44 = sbr.rel (0) target = $region37
    $region36: #{critic_forward.1} parent=1 // pred_region
      _
    $region37: #{critic_forward.1} parent=1 // pred_fallthru
      _
    // Predicated region
    $region38: #{critic_forward.1} parent=1 // pred_check
      _
    $region39: #{critic_forward.1} parent=1 // pred_check_branch
      %46 = sbr.rel (0) target = $region41
    $region40: #{critic_forward.1} parent=1 // pred_region
      _
    $region41: #{critic_forward.1} parent=1 // pred_fallthru
      _
    // Predicated region
    $region42: #{critic_forward.1} parent=1 // pred_check
      _
    $region43: #{critic_forward.1} parent=1 // pred_check_branch
      %48 = sbr.rel (0) target = $region45
    $region44: #{critic_forward.1} parent=1 // pred_region
      _
    $region45: #{critic_forward.1} parent=1 // pred_fallthru
      _
    // Predicated region
    $region46: #{critic_forward.1} parent=1 // pred_check
      _
    $region47: #{critic_forward.1} parent=1 // pred_check_branch
      %50 = sbr.rel (0) target = $region49
    $region48: #{critic_forward.1} parent=1 // pred_region
      %51 = dma.done [#allocation5], 4096
    $region49: #{critic_forward.1} parent=1 // pred_fallthru
      _
    %v53 = vld [vmem:[%s0] ss:$2 sm:$0xff]
    %s54 = scalar_lea.vmem %s0, 16
    %v55 = vld [vmem:[%s54] ss:$2 sm:$0xff]
    %s56 = scalar_lea.vmem %s0, 32
    %v57 = vld [vmem:[%s56] ss:$2 sm:$0xff]
    %s58 = scalar_lea.vmem %s0, 48
    %v59 = vld [vmem:[%s58] ss:$2 sm:$0xff]
    %s60 = scalar_lea.vmem %s0, 64
    %v61 = vld [vmem:[%s60] ss:$2 sm:$0xff]
    %s62 = scalar_lea.vmem %s0, 80
    %v63 = vld [vmem:[%s62] ss:$2 sm:$0xff]
    %v64 = vld [vmem:[%s1] sm:$0x1]
    %66 = vset.pattern.permute.xlu0 0
    %67 = vperm.xlu0 %66, %v53
    %v68 = vpop.permute.xlu0 %67
    %71 = vset.pattern.permute.xlu0 0
    %72 = vperm.xlu0 %71, %v55
    %v73 = vpop.permute.xlu0 %72
    %76 = vset.pattern.permute.xlu0 0
    %77 = vperm.xlu0 %76, %v57
    %v78 = vpop.permute.xlu0 %77
    %81 = vset.pattern.permute.xlu0 0
    %82 = vperm.xlu0 %81, %v59
    %v83 = vpop.permute.xlu0 %82
    %86 = vset.pattern.permute.xlu0 0
    %87 = vperm.xlu0 %86, %v61
    %v88 = vpop.permute.xlu0 %87
    %91 = vset.pattern.permute.xlu0 0
    %92 = vperm.xlu0 %91, %v63
    %v93 = vpop.permute.xlu0 %92
    %v95 = vlaneseq
    %v96 = vshrl.u32 %v95, 7
    %v97 = vsub.s32 0, %v96
    %v98 = vrot.slane %v64, %v97
    %v99 = vmul.f32 %v68, %v98
    %v100 = vmul.f32 %v73, %v98
    %v101 = vmul.f32 %v78, %v98
    %v102 = vmul.f32 %v83, %v98
    %v103 = vmul.f32 %v88, %v98
    %v104 = vmul.f32 %v93, %v98
    %s105 = scalar_lea.vmem %s0, 1
    %v106 = vld [vmem:[%s105] ss:$2 sm:$0xff]
    %s107 = scalar_lea.vmem %s0, 17
    %v108 = vld [vmem:[%s107] ss:$2 sm:$0xff]
    %s109 = scalar_lea.vmem %s0, 33
    %v110 = vld [vmem:[%s109] ss:$2 sm:$0xff]
    %s111 = scalar_lea.vmem %s0, 49
    %v112 = vld [vmem:[%s111] ss:$2 sm:$0xff]
    %s113 = scalar_lea.vmem %s0, 65
    %v114 = vld [vmem:[%s113] ss:$2 sm:$0xff]
    %s115 = scalar_lea.vmem %s0, 81
    %v116 = vld [vmem:[%s115] ss:$2 sm:$0xff]
    %v117 = vld [vmem:[%s1 + $0x1] sm:$0x1]
    %119 = vset.pattern.permute.xlu0 0
    %120 = vperm.xlu0 %119, %v106
    %v121 = vpop.permute.xlu0 %120
    %124 = vset.pattern.permute.xlu0 0
    %125 = vperm.xlu0 %124, %v108
    %v126 = vpop.permute.xlu0 %125
    %129 = vset.pattern.permute.xlu0 0
    %130 = vperm.xlu0 %129, %v110
    %v131 = vpop.permute.xlu0 %130
    %134 = vset.pattern.permute.xlu0 0
    %135 = vperm.xlu0 %134, %v112
    %v136 = vpop.permute.xlu0 %135
    %139 = vset.pattern.permute.xlu0 0
    %140 = vperm.xlu0 %139, %v114
    %v141 = vpop.permute.xlu0 %140
    %144 = vset.pattern.permute.xlu0 0
    %145 = vperm.xlu0 %144, %v116
    %v146 = vpop.permute.xlu0 %145
    %v148 = vlaneseq
    %v149 = vshrl.u32 %v148, 7
    %v150 = vsub.s32 0, %v149
    %v151 = vrot.slane %v117, %v150
    %v152 = vmul.f32 %v121, %v151
    %v153 = vmul.f32 %v126, %v151
    %v154 = vmul.f32 %v131, %v151
    %v155 = vmul.f32 %v136, %v151
    %v156 = vmul.f32 %v141, %v151
    %v157 = vmul.f32 %v146, %v151
    %v158 = vadd.f32 %v99, %v152
    %v159 = vadd.f32 %v100, %v153
    %v160 = vadd.f32 %v101, %v154
    %v161 = vadd.f32 %v102, %v155
    %v162 = vadd.f32 %v103, %v156
    %v163 = vadd.f32 %v104, %v157
    %s164 = scalar_lea.vmem %s0, 2
    %v165 = vld [vmem:[%s164] ss:$2 sm:$0xff]
    %s166 = scalar_lea.vmem %s0, 18
    %v167 = vld [vmem:[%s166] ss:$2 sm:$0xff]
    %s168 = scalar_lea.vmem %s0, 34
    %v169 = vld [vmem:[%s168] ss:$2 sm:$0xff]
    %s170 = scalar_lea.vmem %s0, 50
    %v171 = vld [vmem:[%s170] ss:$2 sm:$0xff]
    %s172 = scalar_lea.vmem %s0, 66
    %v173 = vld [vmem:[%s172] ss:$2 sm:$0xff]
    %s174 = scalar_lea.vmem %s0, 82
    %v175 = vld [vmem:[%s174] ss:$2 sm:$0xff]
    %v176 = vld [vmem:[%s1 + $0x2] sm:$0x1]
    %178 = vset.pattern.permute.xlu0 0
    %179 = vperm.xlu0 %178, %v165
    %v180 = vpop.permute.xlu0 %179
    %183 = vset.pattern.permute.xlu0 0
    %184 = vperm.xlu0 %183, %v167
    %v185 = vpop.permute.xlu0 %184
    %188 = vset.pattern.permute.xlu0 0
    %189 = vperm.xlu0 %188, %v169
    %v190 = vpop.permute.xlu0 %189
    %193 = vset.pattern.permute.xlu0 0
    %194 = vperm.xlu0 %193, %v171
    %v195 = vpop.permute.xlu0 %194
    %198 = vset.pattern.permute.xlu0 0
    %199 = vperm.xlu0 %198, %v173
    %v200 = vpop.permute.xlu0 %199
    %203 = vset.pattern.permute.xlu0 0
    %204 = vperm.xlu0 %203, %v175
    %v205 = vpop.permute.xlu0 %204
    %v207 = vlaneseq
    %v208 = vshrl.u32 %v207, 7
    %v209 = vsub.s32 0, %v208
    %v210 = vrot.slane %v176, %v209
    %v211 = vmul.f32 %v180, %v210
    %v212 = vmul.f32 %v185, %v210
    %v213 = vmul.f32 %v190, %v210
    %v214 = vmul.f32 %v195, %v210
    %v215 = vmul.f32 %v200, %v210
    %v216 = vmul.f32 %v205, %v210
    %v217 = vadd.f32 %v158, %v211
    %v218 = vadd.f32 %v159, %v212
    %v219 = vadd.f32 %v160, %v213
    %v220 = vadd.f32 %v161, %v214
    %v221 = vadd.f32 %v162, %v215
    %v222 = vadd.f32 %v163, %v216
    %s223 = scalar_lea.vmem %s0, 3
    %v224 = vld [vmem:[%s223] ss:$2 sm:$0xff]
    %s225 = scalar_lea.vmem %s0, 19
    %v226 = vld [vmem:[%s225] ss:$2 sm:$0xff]
    %s227 = scalar_lea.vmem %s0, 35
    %v228 = vld [vmem:[%s227] ss:$2 sm:$0xff]
    %s229 = scalar_lea.vmem %s0, 51
    %v230 = vld [vmem:[%s229] ss:$2 sm:$0xff]
    %s231 = scalar_lea.vmem %s0, 67
    %v232 = vld [vmem:[%s231] ss:$2 sm:$0xff]
    %s233 = scalar_lea.vmem %s0, 83
    %v234 = vld [vmem:[%s233] ss:$2 sm:$0xff]
    %v235 = vld [vmem:[%s1 + $0x3] sm:$0x1]
    %237 = vset.pattern.permute.xlu0 0
    %238 = vperm.xlu0 %237, %v224
    %v239 = vpop.permute.xlu0 %238
    %242 = vset.pattern.permute.xlu0 0
    %243 = vperm.xlu0 %242, %v226
    %v244 = vpop.permute.xlu0 %243
    %247 = vset.pattern.permute.xlu0 0
    %248 = vperm.xlu0 %247, %v228
    %v249 = vpop.permute.xlu0 %248
    %252 = vset.pattern.permute.xlu0 0
    %253 = vperm.xlu0 %252, %v230
    %v254 = vpop.permute.xlu0 %253
    %257 = vset.pattern.permute.xlu0 0
    %258 = vperm.xlu0 %257, %v232
    %v259 = vpop.permute.xlu0 %258
    %262 = vset.pattern.permute.xlu0 0
    %263 = vperm.xlu0 %262, %v234
    %v264 = vpop.permute.xlu0 %263
    %v266 = vlaneseq
    %v267 = vshrl.u32 %v266, 7
    %v268 = vsub.s32 0, %v267
    %v269 = vrot.slane %v235, %v268
    %v270 = vmul.f32 %v239, %v269
    %v271 = vmul.f32 %v244, %v269
    %v272 = vmul.f32 %v249, %v269
    %v273 = vmul.f32 %v254, %v269
    %v274 = vmul.f32 %v259, %v269
    %v275 = vmul.f32 %v264, %v269
    %v276 = vadd.f32 %v217, %v270
    %v277 = vadd.f32 %v218, %v271
    %v278 = vadd.f32 %v219, %v272
    %v279 = vadd.f32 %v220, %v273
    %v280 = vadd.f32 %v221, %v274
    %v281 = vadd.f32 %v222, %v275
    %v282 = vld [vmem:[%s9] sm:$0xff]
    %v283 = vld [vmem:[%s9 + $0x8] sm:$0xff]
    %v284 = vld [vmem:[%s9 + $0x10] sm:$0xff]
    %v285 = vld [vmem:[%s9 + $0x18] sm:$0xff]
    %v286 = vld [vmem:[%s9 + $0x20] sm:$0xff]
    %v287 = vld [vmem:[%s9 + $0x28] sm:$0xff]
    %289 = vset.pattern.permute.xlu0 0
    %290 = vperm.xlu0 %289, %v282
    %v291 = vpop.permute.xlu0 %290
    %294 = vset.pattern.permute.xlu0 0
    %295 = vperm.xlu0 %294, %v283
    %v296 = vpop.permute.xlu0 %295
    %299 = vset.pattern.permute.xlu0 0
    %300 = vperm.xlu0 %299, %v284
    %v301 = vpop.permute.xlu0 %300
    %304 = vset.pattern.permute.xlu0 0
    %305 = vperm.xlu0 %304, %v285
    %v306 = vpop.permute.xlu0 %305
    %309 = vset.pattern.permute.xlu0 0
    %310 = vperm.xlu0 %309, %v286
    %v311 = vpop.permute.xlu0 %310
    %314 = vset.pattern.permute.xlu0 0
    %315 = vperm.xlu0 %314, %v287
    %v316 = vpop.permute.xlu0 %315
    %v318 = vmul.f32 %v276, %v291
    %v319 = vmul.f32 %v277, %v296
    %v320 = vmul.f32 %v278, %v301
    %v321 = vmul.f32 %v279, %v306
    %v322 = vmul.f32 %v280, %v311
    %v323 = vmul.f32 %v281, %v316
    %v324 = vadd.f32 %v318, %v319
    %v325 = vadd.f32 %v324, %v320
    %v326 = vadd.f32 %v325, %v321
    %v327 = vadd.f32 %v326, %v322
    %v328 = vadd.f32 %v327, %v323
    %v329 = vrot.slane %v328, 4
    %v330 = vadd.f32 %v328, %v329
    %v331 = vrot.slane %v330, 2
    %v332 = vadd.f32 %v330, %v331
    %v333 = vrot.slane %v332, 1
    %v334 = vadd.f32 %v332, %v333
    %v335 = vmul.f32 %v334, 0.02173913
    %v336 = vsub.f32 %v276, %v335
    %v337 = vsub.f32 %v277, %v335
    %v338 = vsub.f32 %v278, %v335
    %v339 = vsub.f32 %v279, %v335
    %v340 = vsub.f32 %v280, %v335
    %v341 = vsub.f32 %v281, %v335
    %v342 = vmul.f32 %v336, %v291
    %v343 = vmul.f32 %v337, %v296
    %v344 = vmul.f32 %v338, %v301
    %v345 = vmul.f32 %v339, %v306
    %v346 = vmul.f32 %v340, %v311
    %v347 = vmul.f32 %v341, %v316
    %v348 = vmul.f32 %v342, %v342
    %v349 = vmul.f32 %v343, %v343
    %v350 = vmul.f32 %v344, %v344
    %v351 = vmul.f32 %v345, %v345
    %v352 = vmul.f32 %v346, %v346
    %v353 = vmul.f32 %v347, %v347
    %v354 = vadd.f32 %v348, %v349
    %v355 = vadd.f32 %v354, %v350
    %v356 = vadd.f32 %v355, %v351
    %v357 = vadd.f32 %v356, %v352
    %v358 = vadd.f32 %v357, %v353
    %v359 = vrot.slane %v358, 4
    %v360 = vadd.f32 %v358, %v359
    %v361 = vrot.slane %v360, 2
    %v362 = vadd.f32 %v360, %v361
    %v363 = vrot.slane %v362, 1
    %v364 = vadd.f32 %v362, %v363
    %v365 = vmul.f32 %v364, 0.02173913
    %v366 = vld [vmem:[%s4] sm:$0x1]
    %v367 = vadd.f32 %v365, 1e-05
    %v368 = vrsqrt.pop %v367
    %v369 = vmul.f32 %v366, %v368
    %v370 = vld [vmem:[%s5] sm:$0x1]
    %v371 = vmul.f32 %v335, %v369
    %v372 = vsub.f32 %v370, %v371
    %v374 = vlaneseq
    %v375 = vshrl.u32 %v374, 7
    %v376 = vsub.s32 0, %v375
    %v377 = vrot.slane %v369, %v376
    %v379 = vmul.f32 %v276, %v377
    %v380 = vmul.f32 %v277, %v377
    %v381 = vmul.f32 %v278, %v377
    %v382 = vmul.f32 %v279, %v377
    %v383 = vmul.f32 %v280, %v377
    %v384 = vmul.f32 %v281, %v377
    %v386 = vlaneseq
    %v387 = vshrl.u32 %v386, 7
    %v388 = vsub.s32 0, %v387
    %v389 = vrot.slane %v372, %v388
    %v391 = vadd.f32 %v379, %v389
    %v392 = vadd.f32 %v380, %v389
    %v393 = vadd.f32 %v381, %v389
    %v394 = vadd.f32 %v382, %v389
    %v395 = vadd.f32 %v383, %v389
    %v396 = vadd.f32 %v384, %v389
    %v397 = vmul.f32 %v391, 0.2
    %v398 = vmul.f32 %v392, 0.2
    %v399 = vmul.f32 %v393, 0.2
    %v400 = vmul.f32 %v394, 0.2
    %v401 = vmul.f32 %v395, 0.2
    %v402 = vmul.f32 %v396, 0.2
    %v403 = vmax.f32 %v391, %v397
    %v404 = vmax.f32 %v392, %v398
    %v405 = vmax.f32 %v393, %v399
    %v406 = vmax.f32 %v394, %v400
    %v407 = vmax.f32 %v395, %v401
    %v408 = vmax.f32 %v396, %v402
    %409 = vst [vmem:[#allocation2 + $0x30] sm:$0xff] 0.0
    %410 = vst [vmem:[#allocation2] sm:$0xff] %v403
    %411 = vst [vmem:[#allocation2 + $0x8] sm:$0xff] %v404
    %412 = vst [vmem:[#allocation2 + $0x10] sm:$0xff] %v405
    %413 = vst [vmem:[#allocation2 + $0x18] sm:$0xff] %v406
    %414 = vst [vmem:[#allocation2 + $0x20] sm:$0xff] %v407
    %415 = vst [vmem:[#allocation2 + $0x28] sm:$0xff] %v408
    %v416 = vld [vmem:[#allocation2] ss:$2 sm:$0xff]
    %s417 = scalar_lea.vmem [#allocation2], 16
    %v418 = vld [vmem:[%s417] ss:$2 sm:$0xff]
    %s419 = scalar_lea.vmem [#allocation2], 32
    %v420 = vld [vmem:[%s419] ss:$2 sm:$0xff]
    %v421 = vpack.c.bf16 %v418, %v416
    %v422 = vpack.c.bf16 %v420, %v420
    %v423 = vld [vmem:[%s2] sm:$0xf]
    %v424 = vld [vmem:[%s2 + $0x4] sm:$0xf]
    %v425 = vld [vmem:[%s2 + $0x8] sm:$0xf]
    %v426 = vld [vmem:[%s2 + $0xc] sm:$0xf]
    %v427 = vld [vmem:[%s2 + $0x10] sm:$0xf]
    %v428 = vld [vmem:[%s2 + $0x14] sm:$0xf]
    %v429 = vld [vmem:[%s2 + $0x18] sm:$0xf]
    %v430 = vld [vmem:[%s2 + $0x1c] sm:$0xf]
    %v431 = vld [vmem:[%s2 + $0x20] sm:$0xf]
    %v432 = vld [vmem:[%s2 + $0x24] sm:$0xf]
    %v433 = vld [vmem:[%s2 + $0x28] sm:$0xf]
    %v434 = vld [vmem:[%s2 + $0x2c] sm:$0xf]
    %v435 = vld [vmem:[%s2 + $0x30] sm:$0xf]
    %v436 = vld [vmem:[%s2 + $0x34] sm:$0xf]
    %v437 = vld [vmem:[%s2 + $0x38] sm:$0xf]
    %v438 = vld [vmem:[%s2 + $0x3c] sm:$0xf]
    %s439 = scalar_lea.vmem [#allocation2], 1
    %v440 = vld [vmem:[%s439] ss:$2 sm:$0xff]
    %s441 = scalar_lea.vmem [#allocation2], 17
    %v442 = vld [vmem:[%s441] ss:$2 sm:$0xff]
    %s443 = scalar_lea.vmem [#allocation2], 33
    %v444 = vld [vmem:[%s443] ss:$2 sm:$0xff]
    %v445 = vpack.c.bf16 %v442, %v440
    %v446 = vpack.c.bf16 %v444, %v444
    %s447 = scalar_lea.vmem %s2, 64
    %v448 = vld [vmem:[%s447] sm:$0xf]
    %v449 = vld [vmem:[%s447 + $0x4] sm:$0xf]
    %v450 = vld [vmem:[%s447 + $0x8] sm:$0xf]
    %v451 = vld [vmem:[%s447 + $0xc] sm:$0xf]
    %v452 = vld [vmem:[%s447 + $0x10] sm:$0xf]
    %v453 = vld [vmem:[%s447 + $0x14] sm:$0xf]
    %v454 = vld [vmem:[%s447 + $0x18] sm:$0xf]
    %v455 = vld [vmem:[%s447 + $0x1c] sm:$0xf]
    %v456 = vld [vmem:[%s447 + $0x20] sm:$0xf]
    %v457 = vld [vmem:[%s447 + $0x24] sm:$0xf]
    %v458 = vld [vmem:[%s447 + $0x28] sm:$0xf]
    %v459 = vld [vmem:[%s447 + $0x2c] sm:$0xf]
    %v460 = vld [vmem:[%s447 + $0x30] sm:$0xf]
    %v461 = vld [vmem:[%s447 + $0x34] sm:$0xf]
    %v462 = vld [vmem:[%s447 + $0x38] sm:$0xf]
    %v463 = vld [vmem:[%s447 + $0x3c] sm:$0xf]
    %v480 = vunpack.c.l.b16 %v448
    %v481 = vunpack.c.l.b16 %v449
    %v482 = vunpack.c.l.b16 %v450
    %v483 = vunpack.c.l.b16 %v451
    %v484 = vunpack.c.l.b16 %v452
    %v485 = vunpack.c.l.b16 %v453
    %v486 = vunpack.c.l.b16 %v454
    %v487 = vunpack.c.l.b16 %v455
    %v488 = vunpack.c.l.b16 %v456
    %v489 = vunpack.c.l.b16 %v457
    %v490 = vunpack.c.l.b16 %v458
    %v491 = vunpack.c.l.b16 %v459
    %v492 = vunpack.c.l.b16 %v460
    %v493 = vunpack.c.l.b16 %v461
    %v494 = vunpack.c.l.b16 %v462
    %v495 = vunpack.c.l.b16 %v463
    %v496 = vpack.c.b16 %v481, %v480
    %v497 = vpack.c.b16 %v483, %v482
    %v498 = vpack.c.b16 %v485, %v484
    %v499 = vpack.c.b16 %v487, %v486
    %v500 = vpack.c.b16 %v489, %v488
    %v501 = vpack.c.b16 %v491, %v490
    %v502 = vpack.c.b16 %v493, %v492
    %v503 = vpack.c.b16 %v495, %v494
    %512 = vmatprep.subr.bf16.mxu0 0
    %513 = vmatpush1.bf16.msra.mxu0 %v496
    %514 = vmatprep.subr.bf16.mxu0 0
    %515 = vmatpush1.bf16.msra.mxu0 %v497
    %516 = vmatprep.subr.bf16.mxu0 0
    %517 = vmatpush1.bf16.msra.mxu0 %v498
    %518 = vmatprep.subr.bf16.mxu0 0
    %519 = vmatpush1.bf16.msra.mxu0 %v499
    %520 = vmatprep.subr.bf16.mxu0 0
    %521 = vmatpush1.bf16.msra.mxu0 %v500
    %522 = vmatprep.subr.bf16.mxu0 0
    %523 = vmatpush1.bf16.msra.mxu0 %v501
    %524 = vmatprep.subr.bf16.mxu0 0
    %525 = vmatpush1.bf16.msra.mxu0 %v502
    %526 = vmatprep.subr.bf16.mxu0 0
    %527 = vmatpush1.bf16.msra.mxu0 %v503
    %528 = vmatprep.subr.bf16.mxu0 0
    %529 = vmatpush1.bf16.msra.mxu0 0
    %530 = vmatprep.subr.bf16.mxu0 0
    %531 = vmatpush1.bf16.msra.mxu0 0
    %532 = vmatprep.subr.bf16.mxu0 0
    %533 = vmatpush1.bf16.msra.mxu0 0
    %534 = vmatprep.subr.bf16.mxu0 0
    %535 = vmatpush1.bf16.msra.mxu0 0
    %536 = vmatprep.subr.bf16.mxu0 0
    %537 = vmatpush1.bf16.msra.mxu0 0
    %538 = vmatprep.subr.bf16.mxu0 0
    %539 = vmatpush1.bf16.msra.mxu0 0
    %540 = vmatprep.subr.bf16.mxu0 0
    %541 = vmatpush1.bf16.msra.mxu0 0
    %542 = vmatprep.subr.bf16.mxu0 0
    %543 = vmatpush1.bf16.msra.mxu0 0
    %544 = vmatprep.mubr.bf16.mxu0 0
    %545 = vmatmul.mubr.bf16.gmra.mrb[0].mxu0 %v445
    %v546 = vpop.f32.mrb[0].mxu0
    %v547 = vadd.f32 0.0, %v546
    %v548 = vpop.f32.mrb[0].mxu0
    %v549 = vpop.f32.mrb[0].mxu0
    %v550 = vadd.f32 0.0, %v549
    %v551 = vpop.f32.mrb[0].mxu0
    %552 = vmatprep.mubr.bf16.mxu0 0
    %553 = vmatmul.mubr.bf16.gmra.mrb[0].mxu0 %v446
    %v554 = vpop.f32.mrb[0].mxu0
    %v555 = vadd.f32 0.0, %v554
    %v556 = vpop.f32.mrb[0].mxu0
    %v557 = vpop.f32.mrb[0].mxu0
    %v558 = vpop.f32.mrb[0].mxu0
    %559 = vdwg.mxu0
    %v576 = vunpack.c.l.b16 %v423
    %v577 = vunpack.c.l.b16 %v424
    %v578 = vunpack.c.l.b16 %v425
    %v579 = vunpack.c.l.b16 %v426
    %v580 = vunpack.c.l.b16 %v427
    %v581 = vunpack.c.l.b16 %v428
    %v582 = vunpack.c.l.b16 %v429
    %v583 = vunpack.c.l.b16 %v430
    %v584 = vunpack.c.l.b16 %v431
    %v585 = vunpack.c.l.b16 %v432
    %v586 = vunpack.c.l.b16 %v433
    %v587 = vunpack.c.l.b16 %v434
    %v588 = vunpack.c.l.b16 %v435
    %v589 = vunpack.c.l.b16 %v436
    %v590 = vunpack.c.l.b16 %v437
    %v591 = vunpack.c.l.b16 %v438
    %v592 = vpack.c.b16 %v577, %v576
    %v593 = vpack.c.b16 %v579, %v578
    %v594 = vpack.c.b16 %v581, %v580
    %v595 = vpack.c.b16 %v583, %v582
    %v596 = vpack.c.b16 %v585, %v584
    %v597 = vpack.c.b16 %v587, %v586
    %v598 = vpack.c.b16 %v589, %v588
    %v599 = vpack.c.b16 %v591, %v590
    %608 = vmatprep.subr.bf16.mxu0 0
    %609 = vmatpush1.bf16.msra.mxu0 %v592
    %610 = vmatprep.subr.bf16.mxu0 0
    %611 = vmatpush1.bf16.msra.mxu0 %v593
    %612 = vmatprep.subr.bf16.mxu0 0
    %613 = vmatpush1.bf16.msra.mxu0 %v594
    %614 = vmatprep.subr.bf16.mxu0 0
    %615 = vmatpush1.bf16.msra.mxu0 %v595
    %616 = vmatprep.subr.bf16.mxu0 0
    %617 = vmatpush1.bf16.msra.mxu0 %v596
    %618 = vmatprep.subr.bf16.mxu0 0
    %619 = vmatpush1.bf16.msra.mxu0 %v597
    %620 = vmatprep.subr.bf16.mxu0 0
    %621 = vmatpush1.bf16.msra.mxu0 %v598
    %622 = vmatprep.subr.bf16.mxu0 0
    %623 = vmatpush1.bf16.msra.mxu0 %v599
    %624 = vmatprep.subr.bf16.mxu0 0
    %625 = vmatpush1.bf16.msra.mxu0 0
    %626 = vmatprep.subr.bf16.mxu0 0
    %627 = vmatpush1.bf16.msra.mxu0 0
    %628 = vmatprep.subr.bf16.mxu0 0
    %629 = vmatpush1.bf16.msra.mxu0 0
    %630 = vmatprep.subr.bf16.mxu0 0
    %631 = vmatpush1.bf16.msra.mxu0 0
    %632 = vmatprep.subr.bf16.mxu0 0
    %633 = vmatpush1.bf16.msra.mxu0 0
    %634 = vmatprep.subr.bf16.mxu0 0
    %635 = vmatpush1.bf16.msra.mxu0 0
    %636 = vmatprep.subr.bf16.mxu0 0
    %637 = vmatpush1.bf16.msra.mxu0 0
    %638 = vmatprep.subr.bf16.mxu0 0
    %639 = vmatpush1.bf16.msra.mxu0 0
    %640 = vmatprep.mubr.bf16.mxu0 0
    %641 = vmatmul.mubr.bf16.gmra.mrb[0].mxu0 %v421
    %v642 = vpop.f32.mrb[0].mxu0
    %v643 = vadd.f32 %v547, %v642
    %v644 = vpop.f32.mrb[0].mxu0
    %v645 = vpop.f32.mrb[0].mxu0
    %v646 = vadd.f32 %v550, %v645
    %v647 = vpop.f32.mrb[0].mxu0
    %648 = vmatprep.mubr.bf16.mxu0 0
    %649 = vmatmul.mubr.bf16.gmra.mrb[0].mxu0 %v422
    %v650 = vpop.f32.mrb[0].mxu0
    %v651 = vadd.f32 %v555, %v650
    %v652 = vpop.f32.mrb[0].mxu0
    %v653 = vpop.f32.mrb[0].mxu0
    %v654 = vpop.f32.mrb[0].mxu0
    %655 = vdwg.mxu0
    %s656 = scalar_lea.vmem [#allocation2], 2
    %v657 = vld [vmem:[%s656] ss:$2 sm:$0xff]
    %s658 = scalar_lea.vmem [#allocation2], 18
    %v659 = vld [vmem:[%s658] ss:$2 sm:$0xff]
    %s660 = scalar_lea.vmem [#allocation2], 34
    %v661 = vld [vmem:[%s660] ss:$2 sm:$0xff]
    %v662 = vpack.c.bf16 %v659, %v657
    %v663 = vpack.c.bf16 %v661, %v661
    %s664 = scalar_lea.vmem %s2, 128
    %v665 = vld [vmem:[%s664] sm:$0xf]
    %v666 = vld [vmem:[%s664 + $0x4] sm:$0xf]
    %v667 = vld [vmem:[%s664 + $0x8] sm:$0xf]
    %v668 = vld [vmem:[%s664 + $0xc] sm:$0xf]
    %v669 = vld [vmem:[%s664 + $0x10] sm:$0xf]
    %v670 = vld [vmem:[%s664 + $0x14] sm:$0xf]
    %v671 = vld [vmem:[%s664 + $0x18] sm:$0xf]
    %v672 = vld [vmem:[%s664 + $0x1c] sm:$0xf]
    %v673 = vld [vmem:[%s664 + $0x20] sm:$0xf]
    %v674 = vld [vmem:[%s664 + $0x24] sm:$0xf]
    %v675 = vld [vmem:[%s664 + $0x28] sm:$0xf]
    %v676 = vld [vmem:[%s664 + $0x2c] sm:$0xf]
    %v677 = vld [vmem:[%s664 + $0x30] sm:$0xf]
    %v678 = vld [vmem:[%s664 + $0x34] sm:$0xf]
    %v679 = vld [vmem:[%s664 + $0x38] sm:$0xf]
    %v680 = vld [vmem:[%s664 + $0x3c] sm:$0xf]
    %v697 = vunpack.c.l.b16 %v665
    %v698 = vunpack.c.l.b16 %v666
    %v699 = vunpack.c.l.b16 %v667
    %v700 = vunpack.c.l.b16 %v668
    %v701 = vunpack.c.l.b16 %v669
    %v702 = vunpack.c.l.b16 %v670
    %v703 = vunpack.c.l.b16 %v671
    %v704 = vunpack.c.l.b16 %v672
    %v705 = vunpack.c.l.b16 %v673
    %v706 = vunpack.c.l.b16 %v674
    %v707 = vunpack.c.l.b16 %v675
    %v708 = vunpack.c.l.b16 %v676
    %v709 = vunpack.c.l.b16 %v677
    %v710 = vunpack.c.l.b16 %v678
    %v711 = vunpack.c.l.b16 %v679
    %v712 = vunpack.c.l.b16 %v680
    %v713 = vpack.c.b16 %v698, %v697
    %v714 = vpack.c.b16 %v700, %v699
    %v715 = vpack.c.b16 %v702, %v701
    %v716 = vpack.c.b16 %v704, %v703
    %v717 = vpack.c.b16 %v706, %v705
    %v718 = vpack.c.b16 %v708, %v707
    %v719 = vpack.c.b16 %v710, %v709
    %v720 = vpack.c.b16 %v712, %v711
    %729 = vmatprep.subr.bf16.mxu0 0
    %730 = vmatpush1.bf16.msra.mxu0 %v713
    %731 = vmatprep.subr.bf16.mxu0 0
    %732 = vmatpush1.bf16.msra.mxu0 %v714
    %733 = vmatprep.subr.bf16.mxu0 0
    %734 = vmatpush1.bf16.msra.mxu0 %v715
    %735 = vmatprep.subr.bf16.mxu0 0
    %736 = vmatpush1.bf16.msra.mxu0 %v716
    %737 = vmatprep.subr.bf16.mxu0 0
    %738 = vmatpush1.bf16.msra.mxu0 %v717
    %739 = vmatprep.subr.bf16.mxu0 0
    %740 = vmatpush1.bf16.msra.mxu0 %v718
    %741 = vmatprep.subr.bf16.mxu0 0
    %742 = vmatpush1.bf16.msra.mxu0 %v719
    %743 = vmatprep.subr.bf16.mxu0 0
    %744 = vmatpush1.bf16.msra.mxu0 %v720
    %745 = vmatprep.subr.bf16.mxu0 0
    %746 = vmatpush1.bf16.msra.mxu0 0
    %747 = vmatprep.subr.bf16.mxu0 0
    %748 = vmatpush1.bf16.msra.mxu0 0
    %749 = vmatprep.subr.bf16.mxu0 0
    %750 = vmatpush1.bf16.msra.mxu0 0
    %751 = vmatprep.subr.bf16.mxu0 0
    %752 = vmatpush1.bf16.msra.mxu0 0
    %753 = vmatprep.subr.bf16.mxu0 0
    %754 = vmatpush1.bf16.msra.mxu0 0
    %755 = vmatprep.subr.bf16.mxu0 0
    %756 = vmatpush1.bf16.msra.mxu0 0
    %757 = vmatprep.subr.bf16.mxu0 0
    %758 = vmatpush1.bf16.msra.mxu0 0
    %759 = vmatprep.subr.bf16.mxu0 0
    %760 = vmatpush1.bf16.msra.mxu0 0
    %761 = vmatprep.mubr.bf16.mxu0 0
    %762 = vmatmul.mubr.bf16.gmra.mrb[0].mxu0 %v662
    %v763 = vpop.f32.mrb[0].mxu0
    %v764 = vadd.f32 0.0, %v763
    %v765 = vpop.f32.mrb[0].mxu0
    %v766 = vpop.f32.mrb[0].mxu0
    %v767 = vadd.f32 0.0, %v766
    %v768 = vpop.f32.mrb[0].mxu0
    %769 = vmatprep.mubr.bf16.mxu0 0
    %770 = vmatmul.mubr.bf16.gmra.mrb[0].mxu0 %v663
    %v771 = vpop.f32.mrb[0].mxu0
    %v772 = vadd.f32 0.0, %v771
    %v773 = vpop.f32.mrb[0].mxu0
    %v774 = vpop.f32.mrb[0].mxu0
    %v775 = vpop.f32.mrb[0].mxu0
    %776 = vdwg.mxu0
    %v777 = vadd.f32 %v643, %v764
    %v778 = vadd.f32 %v646, %v767
    %v779 = vadd.f32 %v651, %v772
    %s780 = scalar_lea.vmem [#allocation2], 3
    %v781 = vld [vmem:[%s780] ss:$2 sm:$0xff]
    %s782 = scalar_lea.vmem [#allocation2], 19
    %v783 = vld [vmem:[%s782] ss:$2 sm:$0xff]
    %s784 = scalar_lea.vmem [#allocation2], 35
    %v785 = vld [vmem:[%s784] ss:$2 sm:$0xff]
    %v786 = vpack.c.bf16 %v783, %v781
    %v787 = vpack.c.bf16 %v785, %v785
    %s788 = scalar_lea.vmem %s2, 192
    %v789 = vld [vmem:[%s788] sm:$0xf]
    %v790 = vld [vmem:[%s788 + $0x4] sm:$0xf]
    %v791 = vld [vmem:[%s788 + $0x8] sm:$0xf]
    %v792 = vld [vmem:[%s788 + $0xc] sm:$0xf]
    %v793 = vld [vmem:[%s788 + $0x10] sm:$0xf]
    %v794 = vld [vmem:[%s788 + $0x14] sm:$0xf]
    %v795 = vld [vmem:[%s788 + $0x18] sm:$0xf]
    %v796 = vld [vmem:[%s788 + $0x1c] sm:$0xf]
    %v797 = vld [vmem:[%s788 + $0x20] sm:$0xf]
    %v798 = vld [vmem:[%s788 + $0x24] sm:$0xf]
    %v799 = vld [vmem:[%s788 + $0x28] sm:$0xf]
    %v800 = vld [vmem:[%s788 + $0x2c] sm:$0xf]
    %v801 = vld [vmem:[%s788 + $0x30] sm:$0xf]
    %v802 = vld [vmem:[%s788 + $0x34] sm:$0xf]
    %v803 = vld [vmem:[%s788 + $0x38] sm:$0xf]
    %v804 = vld [vmem:[%s788 + $0x3c] sm:$0xf]
    %v821 = vunpack.c.l.b16 %v789
    %v822 = vunpack.c.l.b16 %v790
    %v823 = vunpack.c.l.b16 %v791
    %v824 = vunpack.c.l.b16 %v792
    %v825 = vunpack.c.l.b16 %v793
    %v826 = vunpack.c.l.b16 %v794
    %v827 = vunpack.c.l.b16 %v795
    %v828 = vunpack.c.l.b16 %v796
    %v829 = vunpack.c.l.b16 %v797
    %v830 = vunpack.c.l.b16 %v798
    %v831 = vunpack.c.l.b16 %v799
    %v832 = vunpack.c.l.b16 %v800
    %v833 = vunpack.c.l.b16 %v801
    %v834 = vunpack.c.l.b16 %v802
    %v835 = vunpack.c.l.b16 %v803
    %v836 = vunpack.c.l.b16 %v804
    %v837 = vpack.c.b16 %v822, %v821
    %v838 = vpack.c.b16 %v824, %v823
    %v839 = vpack.c.b16 %v826, %v825
    %v840 = vpack.c.b16 %v828, %v827
    %v841 = vpack.c.b16 %v830, %v829
    %v842 = vpack.c.b16 %v832, %v831
    %v843 = vpack.c.b16 %v834, %v833
    %v844 = vpack.c.b16 %v836, %v835
    %853 = vmatprep.subr.bf16.mxu0 0
    %854 = vmatpush1.bf16.msra.mxu0 %v837
    %855 = vmatprep.subr.bf16.mxu0 0
    %856 = vmatpush1.bf16.msra.mxu0 %v838
    %857 = vmatprep.subr.bf16.mxu0 0
    %858 = vmatpush1.bf16.msra.mxu0 %v839
    %859 = vmatprep.subr.bf16.mxu0 0
    %860 = vmatpush1.bf16.msra.mxu0 %v840
    %861 = vmatprep.subr.bf16.mxu0 0
    %862 = vmatpush1.bf16.msra.mxu0 %v841
    %863 = vmatprep.subr.bf16.mxu0 0
    %864 = vmatpush1.bf16.msra.mxu0 %v842
    %865 = vmatprep.subr.bf16.mxu0 0
    %866 = vmatpush1.bf16.msra.mxu0 %v843
    %867 = vmatprep.subr.bf16.mxu0 0
    %868 = vmatpush1.bf16.msra.mxu0 %v844
    %869 = vmatprep.subr.bf16.mxu0 0
    %870 = vmatpush1.bf16.msra.mxu0 0
    %871 = vmatprep.subr.bf16.mxu0 0
    %872 = vmatpush1.bf16.msra.mxu0 0
    %873 = vmatprep.subr.bf16.mxu0 0
    %874 = vmatpush1.bf16.msra.mxu0 0
    %875 = vmatprep.subr.bf16.mxu0 0
    %876 = vmatpush1.bf16.msra.mxu0 0
    %877 = vmatprep.subr.bf16.mxu0 0
    %878 = vmatpush1.bf16.msra.mxu0 0
    %879 = vmatprep.subr.bf16.mxu0 0
    %880 = vmatpush1.bf16.msra.mxu0 0
    %881 = vmatprep.subr.bf16.mxu0 0
    %882 = vmatpush1.bf16.msra.mxu0 0
    %883 = vmatprep.subr.bf16.mxu0 0
    %884 = vmatpush1.bf16.msra.mxu0 0
    %885 = vmatprep.mubr.bf16.mxu0 0
    %886 = vmatmul.mubr.bf16.gmra.mrb[0].mxu0 %v786
    %v887 = vpop.f32.mrb[0].mxu0
    %v888 = vadd.f32 0.0, %v887
    %v889 = vpop.f32.mrb[0].mxu0
    %v890 = vpop.f32.mrb[0].mxu0
    %v891 = vadd.f32 0.0, %v890
    %v892 = vpop.f32.mrb[0].mxu0
    %893 = vmatprep.mubr.bf16.mxu0 0
    %894 = vmatmul.mubr.bf16.gmra.mrb[0].mxu0 %v787
    %v895 = vpop.f32.mrb[0].mxu0
    %v896 = vadd.f32 0.0, %v895
    %v897 = vpop.f32.mrb[0].mxu0
    %v898 = vpop.f32.mrb[0].mxu0
    %v899 = vpop.f32.mrb[0].mxu0
    %900 = vdwg.mxu0
    %v901 = vadd.f32 %v777, %v888
    %v902 = vadd.f32 %v778, %v891
    %v903 = vadd.f32 %v779, %v896
    %v904 = vld [vmem:[%s10] sm:$0xff]
    %v905 = vld [vmem:[%s10 + $0x8] sm:$0xff]
    %v906 = vld [vmem:[%s10 + $0x10] sm:$0xff]
    %908 = vset.pattern.permute.xlu0 0
    %909 = vperm.xlu0 %908, %v904
    %v910 = vpop.permute.xlu0 %909
    %913 = vset.pattern.permute.xlu0 0
    %914 = vperm.xlu0 %913, %v905
    %v915 = vpop.permute.xlu0 %914
    %918 = vset.pattern.permute.xlu0 0
    %919 = vperm.xlu0 %918, %v906
    %v920 = vpop.permute.xlu0 %919
    %v922 = vmul.f32 %v901, %v910
    %v923 = vmul.f32 %v902, %v915
    %v924 = vmul.f32 %v903, %v920
    %v925 = vadd.f32 %v922, %v923
    %v926 = vadd.f32 %v925, %v924
    %v927 = vrot.slane %v926, 4
    %v928 = vadd.f32 %v926, %v927
    %v929 = vrot.slane %v928, 2
    %v930 = vadd.f32 %v928, %v929
    %v931 = vrot.slane %v930, 1
    %v932 = vadd.f32 %v930, %v931
    %v933 = vmul.f32 %v932, 0.05
    %v934 = vsub.f32 %v901, %v933
    %v935 = vsub.f32 %v902, %v933
    %v936 = vsub.f32 %v903, %v933
    %v937 = vmul.f32 %v934, %v910
    %v938 = vmul.f32 %v935, %v915
    %v939 = vmul.f32 %v936, %v920
    %v940 = vmul.f32 %v937, %v937
    %v941 = vmul.f32 %v938, %v938
    %v942 = vmul.f32 %v939, %v939
    %v943 = vadd.f32 %v940, %v941
    %v944 = vadd.f32 %v943, %v942
    %v945 = vrot.slane %v944, 4
    %v946 = vadd.f32 %v944, %v945
    %v947 = vrot.slane %v946, 2
    %v948 = vadd.f32 %v946, %v947
    %v949 = vrot.slane %v948, 1
    %v950 = vadd.f32 %v948, %v949
    %v951 = vmul.f32 %v950, 0.05
    %v952 = vld [vmem:[%s6] sm:$0x1]
    %v953 = vadd.f32 %v951, 1e-05
    %v954 = vrsqrt.pop %v953
    %v955 = vmul.f32 %v952, %v954
    %v956 = vld [vmem:[%s7] sm:$0x1]
    %v957 = vmul.f32 %v933, %v955
    %v958 = vsub.f32 %v956, %v957
    %v960 = vlaneseq
    %v961 = vshrl.u32 %v960, 7
    %v962 = vsub.s32 0, %v961
    %v963 = vrot.slane %v955, %v962
    %v965 = vmul.f32 %v901, %v963
    %v966 = vmul.f32 %v902, %v963
    %v967 = vmul.f32 %v903, %v963
    %v969 = vlaneseq
    %v970 = vshrl.u32 %v969, 7
    %v971 = vsub.s32 0, %v970
    %v972 = vrot.slane %v958, %v971
    %v974 = vadd.f32 %v965, %v972
    %v975 = vadd.f32 %v966, %v972
    %v976 = vadd.f32 %v967, %v972
    %v977 = vmul.f32 %v974, 0.2
    %v978 = vmul.f32 %v975, 0.2
    %v979 = vmul.f32 %v976, 0.2
    %v980 = vmax.f32 %v974, %v977
    %v981 = vmax.f32 %v975, %v978
    %v982 = vmax.f32 %v976, %v979
    %983 = vst [vmem:[#allocation3 + $0x18] sm:$0xff] 0.0
    %984 = vst [vmem:[#allocation3] sm:$0xff] %v980
    %985 = vst [vmem:[#allocation3 + $0x8] sm:$0xff] %v981
    %986 = vst [vmem:[#allocation3 + $0x10] sm:$0xff] %v982
    %v987 = vld [vmem:[#allocation3] ss:$2 sm:$0xff]
    %s988 = scalar_lea.vmem [#allocation3], 16
    %v989 = vld [vmem:[%s988] ss:$2 sm:$0xf]
    %v990 = vpack.c.bf16 %v989, %v987
    %v991 = vld [vmem:[#allocation4] sm:$0xf]
    %v992 = vld [vmem:[#allocation4 + $0x4] sm:$0xf]
    %v993 = vld [vmem:[#allocation4 + $0x8] sm:$0xf]
    %v994 = vld [vmem:[#allocation4 + $0xc] sm:$0xf]
    %v995 = vld [vmem:[#allocation4 + $0x10] sm:$0xf]
    %v996 = vld [vmem:[#allocation4 + $0x14] sm:$0xf]
    %v997 = vld [vmem:[#allocation4 + $0x18] sm:$0xf]
    %v998 = vld [vmem:[#allocation4 + $0x1c] sm:$0xf]
    %v999 = vld [vmem:[#allocation4 + $0x20] sm:$0xf]
    %v1000 = vld [vmem:[#allocation4 + $0x24] sm:$0xf]
    %v1001 = vld [vmem:[#allocation4 + $0x28] sm:$0xf]
    %v1002 = vld [vmem:[#allocation4 + $0x2c] sm:$0xf]
    %v1003 = vld [vmem:[#allocation4 + $0x30] sm:$0xf]
    %v1004 = vld [vmem:[#allocation4 + $0x34] sm:$0xf]
    %v1005 = vld [vmem:[#allocation4 + $0x38] sm:$0xf]
    %v1006 = vld [vmem:[#allocation4 + $0x3c] sm:$0xf]
    %s1007 = scalar_lea.vmem [#allocation3], 1
    %v1008 = vld [vmem:[%s1007] ss:$2 sm:$0xff]
    %s1009 = scalar_lea.vmem [#allocation3], 17
    %v1010 = vld [vmem:[%s1009] ss:$2 sm:$0xf]
    %v1011 = vpack.c.bf16 %v1010, %v1008
    %s1012 = scalar_lea.vmem [#allocation4], 64
    %v1013 = vld [vmem:[%s1012] sm:$0xf]
    %v1014 = vld [vmem:[%s1012 + $0x4] sm:$0xf]
    %v1015 = vld [vmem:[%s1012 + $0x8] sm:$0xf]
    %v1016 = vld [vmem:[%s1012 + $0xc] sm:$0xf]
    %v1017 = vld [vmem:[%s1012 + $0x10] sm:$0xf]
    %v1018 = vld [vmem:[%s1012 + $0x14] sm:$0xf]
    %v1019 = vld [vmem:[%s1012 + $0x18] sm:$0xf]
    %v1020 = vld [vmem:[%s1012 + $0x1c] sm:$0xf]
    %v1021 = vld [vmem:[%s1012 + $0x20] sm:$0xf]
    %v1022 = vld [vmem:[%s1012 + $0x24] sm:$0xf]
    %v1023 = vld [vmem:[%s1012 + $0x28] sm:$0xf]
    %v1024 = vld [vmem:[%s1012 + $0x2c] sm:$0xf]
    %v1025 = vld [vmem:[%s1012 + $0x30] sm:$0xf]
    %v1026 = vld [vmem:[%s1012 + $0x34] sm:$0xf]
    %v1027 = vld [vmem:[%s1012 + $0x38] sm:$0xf]
    %v1028 = vld [vmem:[%s1012 + $0x3c] sm:$0xf]
    %v1045 = vunpack.c.l.b16 %v1013
    %v1046 = vunpack.c.l.b16 %v1014
    %v1047 = vunpack.c.l.b16 %v1015
    %v1048 = vunpack.c.l.b16 %v1016
    %v1049 = vunpack.c.l.b16 %v1017
    %v1050 = vunpack.c.l.b16 %v1018
    %v1051 = vunpack.c.l.b16 %v1019
    %v1052 = vunpack.c.l.b16 %v1020
    %v1053 = vunpack.c.l.b16 %v1021
    %v1054 = vunpack.c.l.b16 %v1022
    %v1055 = vunpack.c.l.b16 %v1023
    %v1056 = vunpack.c.l.b16 %v1024
    %v1057 = vunpack.c.l.b16 %v1025
    %v1058 = vunpack.c.l.b16 %v1026
    %v1059 = vunpack.c.l.b16 %v1027
    %v1060 = vunpack.c.l.b16 %v1028
    %v1061 = vpack.c.b16 %v1046, %v1045
    %v1062 = vpack.c.b16 %v1048, %v1047
    %v1063 = vpack.c.b16 %v1050, %v1049
    %v1064 = vpack.c.b16 %v1052, %v1051
    %v1065 = vpack.c.b16 %v1054, %v1053
    %v1066 = vpack.c.b16 %v1056, %v1055
    %v1067 = vpack.c.b16 %v1058, %v1057
    %v1068 = vpack.c.b16 %v1060, %v1059
    %1077 = vmatprep.subr.bf16.mxu0 0
    %1078 = vmatpush1.bf16.msra.mxu0 %v1061
    %1079 = vmatprep.subr.bf16.mxu0 0
    %1080 = vmatpush1.bf16.msra.mxu0 %v1062
    %1081 = vmatprep.subr.bf16.mxu0 0
    %1082 = vmatpush1.bf16.msra.mxu0 %v1063
    %1083 = vmatprep.subr.bf16.mxu0 0
    %1084 = vmatpush1.bf16.msra.mxu0 %v1064
    %1085 = vmatprep.subr.bf16.mxu0 0
    %1086 = vmatpush1.bf16.msra.mxu0 %v1065
    %1087 = vmatprep.subr.bf16.mxu0 0
    %1088 = vmatpush1.bf16.msra.mxu0 %v1066
    %1089 = vmatprep.subr.bf16.mxu0 0
    %1090 = vmatpush1.bf16.msra.mxu0 %v1067
    %1091 = vmatprep.subr.bf16.mxu0 0
    %1092 = vmatpush1.bf16.msra.mxu0 %v1068
    %1093 = vmatprep.subr.bf16.mxu0 0
    %1094 = vmatpush1.bf16.msra.mxu0 0
    %1095 = vmatprep.subr.bf16.mxu0 0
    %1096 = vmatpush1.bf16.msra.mxu0 0
    %1097 = vmatprep.subr.bf16.mxu0 0
    %1098 = vmatpush1.bf16.msra.mxu0 0
    %1099 = vmatprep.subr.bf16.mxu0 0
    %1100 = vmatpush1.bf16.msra.mxu0 0
    %1101 = vmatprep.subr.bf16.mxu0 0
    %1102 = vmatpush1.bf16.msra.mxu0 0
    %1103 = vmatprep.subr.bf16.mxu0 0
    %1104 = vmatpush1.bf16.msra.mxu0 0
    %1105 = vmatprep.subr.bf16.mxu0 0
    %1106 = vmatpush1.bf16.msra.mxu0 0
    %1107 = vmatprep.subr.bf16.mxu0 0
    %1108 = vmatpush1.bf16.msra.mxu0 0
    %1109 = vmatprep.mubr.bf16.mxu0 0
    %1110 = vmatmul.mubr.bf16.gmra.mrb[0].mxu0 %v1011
    %v1111 = vpop.f32.mrb[0].mxu0
    %v1112 = vadd.f32 0.0, %v1111
    %v1113 = vpop.f32.mrb[0].mxu0
    %v1114 = vpop.f32.mrb[0].mxu0
    %v1115 = vadd.f32 0.0, %v1114
    %v1116 = vpop.f32.mrb[0].mxu0
    %1117 = vdwg.mxu0
    %v1134 = vunpack.c.l.b16 %v991
    %v1135 = vunpack.c.l.b16 %v992
    %v1136 = vunpack.c.l.b16 %v993
    %v1137 = vunpack.c.l.b16 %v994
    %v1138 = vunpack.c.l.b16 %v995
    %v1139 = vunpack.c.l.b16 %v996
    %v1140 = vunpack.c.l.b16 %v997
    %v1141 = vunpack.c.l.b16 %v998
    %v1142 = vunpack.c.l.b16 %v999
    %v1143 = vunpack.c.l.b16 %v1000
    %v1144 = vunpack.c.l.b16 %v1001
    %v1145 = vunpack.c.l.b16 %v1002
    %v1146 = vunpack.c.l.b16 %v1003
    %v1147 = vunpack.c.l.b16 %v1004
    %v1148 = vunpack.c.l.b16 %v1005
    %v1149 = vunpack.c.l.b16 %v1006
    %v1150 = vpack.c.b16 %v1135, %v1134
    %v1151 = vpack.c.b16 %v1137, %v1136
    %v1152 = vpack.c.b16 %v1139, %v1138
    %v1153 = vpack.c.b16 %v1141, %v1140
    %v1154 = vpack.c.b16 %v1143, %v1142
    %v1155 = vpack.c.b16 %v1145, %v1144
    %v1156 = vpack.c.b16 %v1147, %v1146
    %v1157 = vpack.c.b16 %v1149, %v1148
    %1166 = vmatprep.subr.bf16.mxu0 0
    %1167 = vmatpush1.bf16.msra.mxu0 %v1150
    %1168 = vmatprep.subr.bf16.mxu0 0
    %1169 = vmatpush1.bf16.msra.mxu0 %v1151
    %1170 = vmatprep.subr.bf16.mxu0 0
    %1171 = vmatpush1.bf16.msra.mxu0 %v1152
    %1172 = vmatprep.subr.bf16.mxu0 0
    %1173 = vmatpush1.bf16.msra.mxu0 %v1153
    %1174 = vmatprep.subr.bf16.mxu0 0
    %1175 = vmatpush1.bf16.msra.mxu0 %v1154
    %1176 = vmatprep.subr.bf16.mxu0 0
    %1177 = vmatpush1.bf16.msra.mxu0 %v1155
    %1178 = vmatprep.subr.bf16.mxu0 0
    %1179 = vmatpush1.bf16.msra.mxu0 %v1156
    %1180 = vmatprep.subr.bf16.mxu0 0
    %1181 = vmatpush1.bf16.msra.mxu0 %v1157
    %1182 = vmatprep.subr.bf16.mxu0 0
    %1183 = vmatpush1.bf16.msra.mxu0 0
    %1184 = vmatprep.subr.bf16.mxu0 0
    %1185 = vmatpush1.bf16.msra.mxu0 0
    %1186 = vmatprep.subr.bf16.mxu0 0
    %1187 = vmatpush1.bf16.msra.mxu0 0
    %1188 = vmatprep.subr.bf16.mxu0 0
    %1189 = vmatpush1.bf16.msra.mxu0 0
    %1190 = vmatprep.subr.bf16.mxu0 0
    %1191 = vmatpush1.bf16.msra.mxu0 0
    %1192 = vmatprep.subr.bf16.mxu0 0
    %1193 = vmatpush1.bf16.msra.mxu0 0
    %1194 = vmatprep.subr.bf16.mxu0 0
    %1195 = vmatpush1.bf16.msra.mxu0 0
    %1196 = vmatprep.subr.bf16.mxu0 0
    %1197 = vmatpush1.bf16.msra.mxu0 0
    %1198 = vmatprep.mubr.bf16.mxu0 0
    %1199 = vmatmul.mubr.bf16.gmra.mrb[0].mxu0 %v990
    %v1200 = vpop.f32.mrb[0].mxu0
    %v1201 = vadd.f32 %v1112, %v1200
    %v1202 = vpop.f32.mrb[0].mxu0
    %v1203 = vpop.f32.mrb[0].mxu0
    %v1204 = vadd.f32 %v1115, %v1203
    %v1205 = vpop.f32.mrb[0].mxu0
    %1206 = vdwg.mxu0
    %s1207 = scalar_lea.vmem [#allocation3], 2
    %v1208 = vld [vmem:[%s1207] ss:$2 sm:$0xff]
    %s1209 = scalar_lea.vmem [#allocation3], 18
    %v1210 = vld [vmem:[%s1209] ss:$2 sm:$0xf]
    %v1211 = vpack.c.bf16 %v1210, %v1208
    %s1212 = scalar_lea.vmem [#allocation4], 128
    %v1213 = vld [vmem:[%s1212] sm:$0xf]
    %v1214 = vld [vmem:[%s1212 + $0x4] sm:$0xf]
    %v1215 = vld [vmem:[%s1212 + $0x8] sm:$0xf]
    %v1216 = vld [vmem:[%s1212 + $0xc] sm:$0xf]
    %v1217 = vld [vmem:[%s1212 + $0x10] sm:$0xf]
    %v1218 = vld [vmem:[%s1212 + $0x14] sm:$0xf]
    %v1219 = vld [vmem:[%s1212 + $0x18] sm:$0xf]
    %v1220 = vld [vmem:[%s1212 + $0x1c] sm:$0xf]
    %v1221 = vld [vmem:[%s1212 + $0x20] sm:$0xf]
    %v1222 = vld [vmem:[%s1212 + $0x24] sm:$0xf]
    %v1223 = vld [vmem:[%s1212 + $0x28] sm:$0xf]
    %v1224 = vld [vmem:[%s1212 + $0x2c] sm:$0xf]
    %v1225 = vld [vmem:[%s1212 + $0x30] sm:$0xf]
    %v1226 = vld [vmem:[%s1212 + $0x34] sm:$0xf]
    %v1227 = vld [vmem:[%s1212 + $0x38] sm:$0xf]
    %v1228 = vld [vmem:[%s1212 + $0x3c] sm:$0xf]
    %v1245 = vunpack.c.l.b16 %v1213
    %v1246 = vunpack.c.l.b16 %v1214
    %v1247 = vunpack.c.l.b16 %v1215
    %v1248 = vunpack.c.l.b16 %v1216
    %v1249 = vunpack.c.l.b16 %v1217
    %v1250 = vunpack.c.l.b16 %v1218
    %v1251 = vunpack.c.l.b16 %v1219
    %v1252 = vunpack.c.l.b16 %v1220
    %v1253 = vunpack.c.l.b16 %v1221
    %v1254 = vunpack.c.l.b16 %v1222
    %v1255 = vunpack.c.l.b16 %v1223
    %v1256 = vunpack.c.l.b16 %v1224
    %v1257 = vunpack.c.l.b16 %v1225
    %v1258 = vunpack.c.l.b16 %v1226
    %v1259 = vunpack.c.l.b16 %v1227
    %v1260 = vunpack.c.l.b16 %v1228
    %v1261 = vpack.c.b16 %v1246, %v1245
    %v1262 = vpack.c.b16 %v1248, %v1247
    %v1263 = vpack.c.b16 %v1250, %v1249
    %v1264 = vpack.c.b16 %v1252, %v1251
    %v1265 = vpack.c.b16 %v1254, %v1253
    %v1266 = vpack.c.b16 %v1256, %v1255
    %v1267 = vpack.c.b16 %v1258, %v1257
    %v1268 = vpack.c.b16 %v1260, %v1259
    %1277 = vmatprep.subr.bf16.mxu0 0
    %1278 = vmatpush1.bf16.msra.mxu0 %v1261
    %1279 = vmatprep.subr.bf16.mxu0 0
    %1280 = vmatpush1.bf16.msra.mxu0 %v1262
    %1281 = vmatprep.subr.bf16.mxu0 0
    %1282 = vmatpush1.bf16.msra.mxu0 %v1263
    %1283 = vmatprep.subr.bf16.mxu0 0
    %1284 = vmatpush1.bf16.msra.mxu0 %v1264
    %1285 = vmatprep.subr.bf16.mxu0 0
    %1286 = vmatpush1.bf16.msra.mxu0 %v1265
    %1287 = vmatprep.subr.bf16.mxu0 0
    %1288 = vmatpush1.bf16.msra.mxu0 %v1266
    %1289 = vmatprep.subr.bf16.mxu0 0
    %1290 = vmatpush1.bf16.msra.mxu0 %v1267
    %1291 = vmatprep.subr.bf16.mxu0 0
    %1292 = vmatpush1.bf16.msra.mxu0 %v1268
    %1293 = vmatprep.subr.bf16.mxu0 0
    %1294 = vmatpush1.bf16.msra.mxu0 0
    %1295 = vmatprep.subr.bf16.mxu0 0
    %1296 = vmatpush1.bf16.msra.mxu0 0
    %1297 = vmatprep.subr.bf16.mxu0 0
    %1298 = vmatpush1.bf16.msra.mxu0 0
    %1299 = vmatprep.subr.bf16.mxu0 0
    %1300 = vmatpush1.bf16.msra.mxu0 0
    %1301 = vmatprep.subr.bf16.mxu0 0
    %1302 = vmatpush1.bf16.msra.mxu0 0
    %1303 = vmatprep.subr.bf16.mxu0 0
    %1304 = vmatpush1.bf16.msra.mxu0 0
    %1305 = vmatprep.subr.bf16.mxu0 0
    %1306 = vmatpush1.bf16.msra.mxu0 0
    %1307 = vmatprep.subr.bf16.mxu0 0
    %1308 = vmatpush1.bf16.msra.mxu0 0
    %1309 = vmatprep.mubr.bf16.mxu0 0
    %1310 = vmatmul.mubr.bf16.gmra.mrb[0].mxu0 %v1211
    %v1311 = vpop.f32.mrb[0].mxu0
    %v1312 = vadd.f32 0.0, %v1311
    %v1313 = vpop.f32.mrb[0].mxu0
    %v1314 = vpop.f32.mrb[0].mxu0
    %v1315 = vadd.f32 0.0, %v1314
    %v1316 = vpop.f32.mrb[0].mxu0
    %1317 = vdwg.mxu0
    %v1318 = vadd.f32 %v1201, %v1312
    %v1319 = vadd.f32 %v1204, %v1315
    %s1320 = scalar_lea.vmem [#allocation3], 3
    %v1321 = vld [vmem:[%s1320] ss:$2 sm:$0xff]
    %s1322 = scalar_lea.vmem [#allocation3], 19
    %v1323 = vld [vmem:[%s1322] ss:$2 sm:$0xf]
    %v1324 = vpack.c.bf16 %v1323, %v1321
    %s1325 = scalar_lea.vmem [#allocation4], 192
    %v1326 = vld [vmem:[%s1325] sm:$0xf]
    %v1327 = vld [vmem:[%s1325 + $0x4] sm:$0xf]
    %v1328 = vld [vmem:[%s1325 + $0x8] sm:$0xf]
    %v1329 = vld [vmem:[%s1325 + $0xc] sm:$0xf]
    %v1330 = vld [vmem:[%s1325 + $0x10] sm:$0xf]
    %v1331 = vld [vmem:[%s1325 + $0x14] sm:$0xf]
    %v1332 = vld [vmem:[%s1325 + $0x18] sm:$0xf]
    %v1333 = vld [vmem:[%s1325 + $0x1c] sm:$0xf]
    %v1334 = vld [vmem:[%s1325 + $0x20] sm:$0xf]
    %v1335 = vld [vmem:[%s1325 + $0x24] sm:$0xf]
    %v1336 = vld [vmem:[%s1325 + $0x28] sm:$0xf]
    %v1337 = vld [vmem:[%s1325 + $0x2c] sm:$0xf]
    %v1338 = vld [vmem:[%s1325 + $0x30] sm:$0xf]
    %v1339 = vld [vmem:[%s1325 + $0x34] sm:$0xf]
    %v1340 = vld [vmem:[%s1325 + $0x38] sm:$0xf]
    %v1341 = vld [vmem:[%s1325 + $0x3c] sm:$0xf]
    %v1358 = vunpack.c.l.b16 %v1326
    %v1359 = vunpack.c.l.b16 %v1327
    %v1360 = vunpack.c.l.b16 %v1328
    %v1361 = vunpack.c.l.b16 %v1329
    %v1362 = vunpack.c.l.b16 %v1330
    %v1363 = vunpack.c.l.b16 %v1331
    %v1364 = vunpack.c.l.b16 %v1332
    %v1365 = vunpack.c.l.b16 %v1333
    %v1366 = vunpack.c.l.b16 %v1334
    %v1367 = vunpack.c.l.b16 %v1335
    %v1368 = vunpack.c.l.b16 %v1336
    %v1369 = vunpack.c.l.b16 %v1337
    %v1370 = vunpack.c.l.b16 %v1338
    %v1371 = vunpack.c.l.b16 %v1339
    %v1372 = vunpack.c.l.b16 %v1340
    %v1373 = vunpack.c.l.b16 %v1341
    %v1374 = vpack.c.b16 %v1359, %v1358
    %v1375 = vpack.c.b16 %v1361, %v1360
    %v1376 = vpack.c.b16 %v1363, %v1362
    %v1377 = vpack.c.b16 %v1365, %v1364
    %v1378 = vpack.c.b16 %v1367, %v1366
    %v1379 = vpack.c.b16 %v1369, %v1368
    %v1380 = vpack.c.b16 %v1371, %v1370
    %v1381 = vpack.c.b16 %v1373, %v1372
    %1390 = vmatprep.subr.bf16.mxu0 0
    %1391 = vmatpush1.bf16.msra.mxu0 %v1374
    %1392 = vmatprep.subr.bf16.mxu0 0
    %1393 = vmatpush1.bf16.msra.mxu0 %v1375
    %1394 = vmatprep.subr.bf16.mxu0 0
    %1395 = vmatpush1.bf16.msra.mxu0 %v1376
    %1396 = vmatprep.subr.bf16.mxu0 0
    %1397 = vmatpush1.bf16.msra.mxu0 %v1377
    %1398 = vmatprep.subr.bf16.mxu0 0
    %1399 = vmatpush1.bf16.msra.mxu0 %v1378
    %1400 = vmatprep.subr.bf16.mxu0 0
    %1401 = vmatpush1.bf16.msra.mxu0 %v1379
    %1402 = vmatprep.subr.bf16.mxu0 0
    %1403 = vmatpush1.bf16.msra.mxu0 %v1380
    %1404 = vmatprep.subr.bf16.mxu0 0
    %1405 = vmatpush1.bf16.msra.mxu0 %v1381
    %1406 = vmatprep.subr.bf16.mxu0 0
    %1407 = vmatpush1.bf16.msra.mxu0 0
    %1408 = vmatprep.subr.bf16.mxu0 0
    %1409 = vmatpush1.bf16.msra.mxu0 0
    %1410 = vmatprep.subr.bf16.mxu0 0
    %1411 = vmatpush1.bf16.msra.mxu0 0
    %1412 = vmatprep.subr.bf16.mxu0 0
    %1413 = vmatpush1.bf16.msra.mxu0 0
    %1414 = vmatprep.subr.bf16.mxu0 0
    %1415 = vmatpush1.bf16.msra.mxu0 0
    %1416 = vmatprep.subr.bf16.mxu0 0
    %1417 = vmatpush1.bf16.msra.mxu0 0
    %1418 = vmatprep.subr.bf16.mxu0 0
    %1419 = vmatpush1.bf16.msra.mxu0 0
    %1420 = vmatprep.subr.bf16.mxu0 0
    %1421 = vmatpush1.bf16.msra.mxu0 0
    %1422 = vmatprep.mubr.bf16.mxu0 0
    %1423 = vmatmul.mubr.bf16.gmra.mrb[0].mxu0 %v1324
    %v1424 = vpop.f32.mrb[0].mxu0
    %v1425 = vadd.f32 0.0, %v1424
    %v1426 = vpop.f32.mrb[0].mxu0
    %v1427 = vpop.f32.mrb[0].mxu0
    %v1428 = vadd.f32 0.0, %v1427
    %v1429 = vpop.f32.mrb[0].mxu0
    %1430 = vdwg.mxu0
    %v1431 = vadd.f32 %v1318, %v1425
    %v1432 = vadd.f32 %v1319, %v1428
    %v1433 = vld [vmem:[%s8] sm:$0x1]
    %v1435 = vlaneseq
    %v1436 = vshrl.u32 %v1435, 7
    %v1437 = vsub.s32 0, %v1436
    %v1438 = vrot.slane %v1433, %v1437
    %v1440 = vadd.f32 %v1431, %v1438
    %v1441 = vadd.f32 %v1432, %v1438
    %1442 = vst [vmem:[%s11] sm:$0xff] %v1440
    %1443 = vst [vmem:[%s11 + $0x8] sm:$0xf] %v1441
    // Predicated region
    $region50: #{critic_forward.1} parent=1 // pred_check
      _
    $region51: #{critic_forward.1} parent=1 // pred_check_branch
      %1445 = sbr.rel (0) target = $region53
    $region52: #{critic_forward.1} parent=1 // pred_region
      _
    $region53: #{critic_forward.1} parent=1 // pred_fallthru
      _
    // Predicated region
    $region54: #{critic_forward.1} parent=1 // pred_check
      _
    $region55: #{critic_forward.1} parent=1 // pred_check_branch
      %1447 = sbr.rel (0) target = $region57
    $region56: #{critic_forward.1} parent=1 // pred_region
      _
    $region57: #{critic_forward.1} parent=1 // pred_fallthru
      _
    %1448 = vsyncpa [#allocation5], 1

</llo_original>
